<compile_context>
chip_gen: v7x
topology: tpu7x:2x2x1
jax: 0.10.0
libtpu: 0.0.40
codegen_flags: <defaults>
</compile_context>

<pallas_src>
import functools
import math

import jax
import jax.numpy as jnp
from jax.experimental import pallas as pl
from jax.experimental.pallas import tpu as pltpu


def _round_up(x, m):
    return (x + m - 1) // m * m


def _vmem_capacity_bytes():
    try:
        return int(pltpu.get_tpu_info().vmem_capacity_bytes)
    except Exception:
        return 128 << 20  # v5e / v6e physical VMEM


def lm_head_kernel(x_ref, w1_ref, b1_ref, g_ref, beta_ref,
                   wout_ref, bout_ref, o_ref, h_scratch, *, ln_eps):
    """Grid = (row tiles, vocab tiles).  At vocab-tile 0 of each row tile the
    dense+gelu+layernorm hidden is computed once (f32 math) into a bf16 VMEM
    scratch; every vocab tile then runs an MXU matmul against a lane-dense
    (E, tv) slab of the pre-transposed output weight plus its bias slice."""
    j = pl.program_id(1)

    @pl.when(j == 0)
    def _():
        # dense: (tn, E) @ (E, E) + (1, E); bf16 operands, f32 accumulation
        h = jnp.dot(x_ref[...].astype(jnp.bfloat16), w1_ref[...],
                    preferred_element_type=jnp.float32) + b1_ref[...]
        # exact erf gelu (f32)
        h = h * 0.5 * (1.0 + jax.lax.erf(h * (1.0 / math.sqrt(2.0))))
        # layer norm over hidden dim (affine), f32
        mean = jnp.mean(h, axis=-1, keepdims=True)
        var = jnp.mean((h - mean) * (h - mean), axis=-1, keepdims=True)
        hn = (h - mean) * jax.lax.rsqrt(var + ln_eps)
        h_scratch[...] = (hn * g_ref[...] + beta_ref[...]).astype(jnp.bfloat16)

    # output projection: (tn, E) @ (E, tv) + (1, tv) -- no in-kernel transpose
    o_ref[...] = (jnp.dot(h_scratch[...], wout_ref[...],
                          preferred_element_type=jnp.float32)
                  + bout_ref[...]).astype(o_ref.dtype)


def prepare_lm_head_params(w1, b1, ln_g, ln_b, weight, bias, *, tv=None):
    """One-time parameter preparation (hoist out of the per-call path).

    w1: [E_in, E_out] (= dense.weight.T), b1: [E], ln_g/ln_b: [E],
    weight: [V, E] (shared embedding), bias: [V].
    Pre-transposes / pads / bf16-casts the output-projection weight so the
    kernel streams lane-dense (E, tv) slabs with no per-call HBM pass."""
    E = w1.shape[0]
    V, E2 = weight.shape
    assert E2 == E and w1.shape == (E, E)

    if tv is None:
        tv = 1024 if V >= 1024 else (512 if V >= 512 else _round_up(V, 128))
    V_pad = _round_up(V, tv)

    w_out_t = weight.T                                   # [E, V]
    bias_p = bias
    if V_pad != V:
        w_out_t = jnp.pad(w_out_t, ((0, 0), (0, V_pad - V)))
        bias_p = jnp.pad(bias_p, (0, V_pad - V))

    return dict(
        E=E, V=V, V_pad=V_pad, tv=tv,
        w1=w1.astype(jnp.bfloat16),
        b1=b1.reshape(1, E).astype(jnp.float32),
        gamma=ln_g.reshape(1, E).astype(jnp.float32),
        beta=ln_b.reshape(1, E).astype(jnp.float32),
        w_out=w_out_t.astype(jnp.bfloat16),              # [E, V_pad] bf16
        b_out=bias_p.reshape(1, V_pad).astype(jnp.float32),
    )


def roberta_lm_head(features, params, *, tn=None, out_dtype=None, ln_eps=1e-5):
    """features: [N, E] f32; params from prepare_lm_head_params.
    Returns logits [N, V] (dtype = out_dtype or features.dtype)."""
    N, E = features.shape
    assert E == params["E"]
    V, V_pad, tv = params["V"], params["V_pad"], params["tv"]
    out_dtype = features.dtype if out_dtype is None else out_dtype
    out_itemsize = jnp.dtype(out_dtype).itemsize

    # ---- row-tile selection -------------------------------------------------
    if tn is None:
        if N >= 2048:
            tn = 1024          # compute-bound on the weight stream on all gens
        elif N >= 512:
            tn = 512
        elif N >= 256:
            tn = 256
        else:
            tn = _round_up(N, 8)
        # Keep >= 2 row tiles so the "parallel" row axis can shard across the
        # two TensorCores on v7x (harmless on 1-TC v5e/v6e).
        if N >= 16 and pl.cdiv(N, tn) < 2:
            tn = _round_up(pl.cdiv(N, 2), 8)

    # ---- VMEM budget (conservative: assume double-buffering everywhere) -----
    cap = _vmem_capacity_bytes()
    soft_cap = min(cap * 3 // 4, 100 << 20)   # ~48 MiB on v7x, ~96 MiB on v5e/v6e

    def vmem_need(tn_, tv_):
        return (2 * (tn_ * E * 4            # x tile (f32)
                     + E * E * 2            # dense weight (bf16)
                     + 3 * E * 4            # b1 / gamma / beta
                     + E * tv_ * 2          # output-weight slab (bf16)
                     + tv_ * 4              # bias slice
                     + tn_ * tv_ * out_itemsize)   # output tile
                + tn_ * E * 2)              # hidden scratch (bf16)

    while (vmem_need(tn, tv) + (4 << 20) > soft_cap and tv > 512
           and tv % 2 == 0 and (tv // 2) % 128 == 0 and V_pad % (tv // 2) == 0):
        tv //= 2
    while (vmem_need(tn, tv) + (4 << 20) > soft_cap and tn > 256
           and tn % 2 == 0 and (tn // 2) % 8 == 0):
        tn //= 2
    vmem_limit = int(min(max(vmem_need(tn, tv) + (4 << 20), 32 << 20),
                         int(cap * 0.9)))

    # ---- padding / grid -----------------------------------------------------
    N_pad = _round_up(N, tn)
    x = features
    if N_pad != N:
        x = jnp.pad(x, ((0, N_pad - N), (0, 0)))

    grid = (N_pad // tn, V_pad // tv)

    cost = pl.CostEstimate(
        flops=2 * N_pad * E * E + 2 * N_pad * E * V_pad,
        transcendentals=N_pad * E,
        bytes_accessed=(N_pad * E * 4
                        + (N_pad // tn) * E * E * 2
                        + (N_pad // tn) * E * V_pad * 2
                        + N_pad * V_pad * out_itemsize),
    )

    def build(single_buffer_constants):
        def const_spec(shape, index_map):
            # Blocks that never change index within a row-tile pass don't need
            # double buffering; reclaiming that VMEM funds the bigger tiles.
            if single_buffer_constants:
                return pl.BlockSpec(shape, index_map,
                                    pipeline_mode=pl.Buffered(1))
            return pl.BlockSpec(shape, index_map)

        return pl.pallas_call(
            functools.partial(lm_head_kernel, ln_eps=ln_eps),
            out_shape=jax.ShapeDtypeStruct((N_pad, V_pad), out_dtype),
            grid_spec=pltpu.PrefetchScalarGridSpec(
                num_scalar_prefetch=0,
                grid=grid,
                in_specs=[
                    const_spec((tn, E), lambda i, j: (i, 0)),    # feature rows
                    const_spec((E, E), lambda i, j: (0, 0)),     # dense weight (bf16)
                    const_spec((1, E), lambda i, j: (0, 0)),     # dense bias
                    const_spec((1, E), lambda i, j: (0, 0)),     # LN gamma
                    const_spec((1, E), lambda i, j: (0, 0)),     # LN beta
                    pl.BlockSpec((E, tv), lambda i, j: (0, j)),  # out-proj weight slab (bf16)
                    pl.BlockSpec((1, tv), lambda i, j: (0, j)),  # out-proj bias slice
                ],
                out_specs=pl.BlockSpec((tn, tv), lambda i, j: (i, j)),
                scratch_shapes=[pltpu.VMEM((tn, E), jnp.bfloat16)],
            ),
            compiler_params=pltpu.CompilerParams(
                dimension_semantics=("parallel", "arbitrary"),
                vmem_limit_bytes=vmem_limit),
            cost_estimate=cost,
        )

    args = (x, params["w1"], params["b1"], params["gamma"], params["beta"],
            params["w_out"], params["b_out"])
    try:
        out = build(True)(*args)
    except Exception:
        # Fallback if Buffered(1) pipeline hints are rejected by this compiler
        # version; default double buffering is always correct.
        out = build(False)(*args)

    return out[:N, :V]


def reference(features, w1, b1, ln_g, ln_b, weight, bias, *, ln_eps=1e-5):
    h = features @ w1 + b1
    h = h * 0.5 * (1.0 + jax.lax.erf(h / math.sqrt(2.0)))
    mean = jnp.mean(h, axis=-1, keepdims=True)
    var = jnp.mean((h - mean) ** 2, axis=-1, keepdims=True)
    h = (h - mean) * jax.lax.rsqrt(var + ln_eps) * ln_g + ln_b
    return h @ weight.T + bias


if __name__ == "__main__":
    B, T, E, V = 2, 8, 32, 256  # batch, seq, embed_dim, output_dim
    key = jax.random.PRNGKey(0)
    k0, k1, k2, k3 = jax.random.split(key, 4)

    features = jax.random.normal(k0, (B, T, E), dtype=jnp.float32)

    # Deterministic parameter init:
    #   dense: Linear(E, E)  -> w1 stored here already transposed as [E_in, E_out]
    #   layer_norm: gamma ones, beta zeros
    #   weight: [V, E] (shared embedding), bias zeros(V)
    w1 = 0.02 * jax.random.normal(k1, (E, E), dtype=jnp.float32)
    b1 = 0.02 * jax.random.normal(k2, (E,), dtype=jnp.float32)
    ln_g = jnp.ones((E,), dtype=jnp.float32)
    ln_b = jnp.zeros((E,), dtype=jnp.float32)
    weight = 0.02 * jax.random.normal(k3, (V, E), dtype=jnp.float32)
    bias = jnp.zeros((V,), dtype=jnp.float32)

    # One-time parameter prep (hoisted out of the per-call path).
    params = prepare_lm_head_params(w1, b1, ln_g, ln_b, weight, bias)

    x2d = features.reshape(B * T, E)
    out = roberta_lm_head(x2d, params)
    out = jax.block_until_ready(out).reshape(B, T, V)

    ref = reference(x2d, w1, b1, ln_g, ln_b, weight, bias).reshape(B, T, V)
    assert out.shape == (B, T, V)
    max_err = float(jnp.max(jnp.abs(out - ref)))
    # bf16 matmul operands / bf16 hidden (f32 accumulation) => ~0.3-0.5% rel err.
    assert jnp.allclose(out, ref, atol=5e-3, rtol=5e-2), \
        f"mismatch vs reference (max abs err {max_err})"
    print("KERNEL_OK")
</pallas_src>

<mosaic_0001>
module attributes {stable_mosaic.version = 11 : i64} {
  func.func @lm_head_kernel(%arg0: i32, %arg1: i32, %arg2: memref<8x32xf32, #tpu.memory_space<vmem>>, %arg3: memref<32x32xbf16, #tpu.memory_space<vmem>>, %arg4: memref<1x32xf32, #tpu.memory_space<vmem>>, %arg5: memref<1x32xf32, #tpu.memory_space<vmem>>, %arg6: memref<1x32xf32, #tpu.memory_space<vmem>>, %arg7: memref<32x256xbf16, #tpu.memory_space<vmem>>, %arg8: memref<1x256xf32, #tpu.memory_space<vmem>>, %arg9: memref<8x256xf32, #tpu.memory_space<vmem>>, %arg10: memref<8x32xbf16, #tpu.memory_space<vmem>>) attributes {dimension_semantics = [#tpu.dimension_semantics<parallel>, #tpu.dimension_semantics<arbitrary>], iteration_bounds = array<i64: 2, 1>, scalar_prefetch = 0 : i64, scratch_operands = 1 : i64, tpu.core_type = #tpu.core_type<tc>, window_params = [{pipeline_mode = #tpu.pipeline_mode<synchronous>, transform_indices = @transform_0, window_bounds = array<i64: 8, 32>}, {pipeline_mode = #tpu.pipeline_mode<synchronous>, transform_indices = @transform_1, window_bounds = array<i64: 32, 32>}, {pipeline_mode = #tpu.pipeline_mode<synchronous>, transform_indices = @transform_2, window_bounds = array<i64: 1, 32>}, {pipeline_mode = #tpu.pipeline_mode<synchronous>, transform_indices = @transform_3, window_bounds = array<i64: 1, 32>}, {pipeline_mode = #tpu.pipeline_mode<synchronous>, transform_indices = @transform_4, window_bounds = array<i64: 1, 32>}, {transform_indices = @transform_5, window_bounds = array<i64: 32, 256>}, {transform_indices = @transform_6, window_bounds = array<i64: 1, 256>}, {transform_indices = @transform_7, window_bounds = array<i64: 8, 256>}]} {
    %c0_i32 = arith.constant 0 : i32
    %0 = arith.cmpi eq, %arg1, %c0_i32 : i32
    %1 = arith.extui %0 : i1 to i32
    %c0_i32_0 = arith.constant 0 : i32
    %2 = arith.cmpi ne, %1, %c0_i32_0 : i32
    scf.if %2 {
      %c0_8 = arith.constant 0 : index
      %c0_9 = arith.constant 0 : index
      %10 = vector.load %arg2[%c0_8, %c0_9] : memref<8x32xf32, #tpu.memory_space<vmem>>, vector<8x32xf32>
      %11 = arith.truncf %10 : vector<8x32xf32> to vector<8x32xbf16>
      %c0_10 = arith.constant 0 : index
      %c0_11 = arith.constant 0 : index
      %12 = vector.load %arg3[%c0_10, %c0_11] : memref<32x32xbf16, #tpu.memory_space<vmem>>, vector<32x32xbf16>
      %cst_12 = arith.constant dense<0.000000e+00> : vector<8x32xf32>
      %13 = tpu.matmul %11, %12, %cst_12 {dimension_numbers = #tpu.dot_dimension_numbers<[1], [0], [0], [1], [0, 0, 1, 1], [], []>} : vector<8x32xbf16>, vector<32x32xbf16>, vector<8x32xf32> -> vector<8x32xf32>
      %c0_13 = arith.constant 0 : index
      %c0_14 = arith.constant 0 : index
      %14 = vector.load %arg4[%c0_13, %c0_14] : memref<1x32xf32, #tpu.memory_space<vmem>>, vector<1x32xf32>
      %15 = vector.broadcast %14 : vector<1x32xf32> to vector<8x32xf32>
      %16 = arith.addf %13, %15 : vector<8x32xf32>
      %cst_15 = arith.constant 5.000000e-01 : f32
      %17 = vector.broadcast %cst_15 : f32 to vector<8x32xf32>
      %18 = arith.mulf %16, %17 : vector<8x32xf32>
      %cst_16 = arith.constant 0.707106769 : f32
      %19 = vector.broadcast %cst_16 : f32 to vector<8x32xf32>
      %20 = arith.mulf %16, %19 : vector<8x32xf32>
      %21 = math.erf %20 : vector<8x32xf32>
      %cst_17 = arith.constant 1.000000e+00 : f32
      %22 = vector.broadcast %cst_17 : f32 to vector<8x32xf32>
      %23 = arith.addf %22, %21 : vector<8x32xf32>
      %24 = arith.mulf %18, %23 : vector<8x32xf32>
      %cst_18 = arith.constant dense<0.000000e+00> : vector<8xf32>
      %25 = vector.multi_reduction <add>, %24, %cst_18 [1] : vector<8x32xf32> to vector<8xf32>
      %26 = vector.shape_cast %25 : vector<8xf32> to vector<8x1xf32>
      %cst_19 = arith.constant 3.200000e+01 : f32
      %27 = vector.broadcast %cst_19 : f32 to vector<8x1xf32>
      %28 = arith.divf %26, %27 : vector<8x1xf32>
      %29 = vector.broadcast %28 : vector<8x1xf32> to vector<8x32xf32>
      %30 = arith.subf %24, %29 : vector<8x32xf32>
      %31 = vector.broadcast %28 : vector<8x1xf32> to vector<8x32xf32>
      %32 = arith.subf %24, %31 : vector<8x32xf32>
      %33 = arith.mulf %30, %32 : vector<8x32xf32>
      %cst_20 = arith.constant dense<0.000000e+00> : vector<8xf32>
      %34 = vector.multi_reduction <add>, %33, %cst_20 [1] : vector<8x32xf32> to vector<8xf32>
      %35 = vector.shape_cast %34 : vector<8xf32> to vector<8x1xf32>
      %cst_21 = arith.constant 3.200000e+01 : f32
      %36 = vector.broadcast %cst_21 : f32 to vector<8x1xf32>
      %37 = arith.divf %35, %36 : vector<8x1xf32>
      %38 = vector.broadcast %28 : vector<8x1xf32> to vector<8x32xf32>
      %39 = arith.subf %24, %38 : vector<8x32xf32>
      %cst_22 = arith.constant 9.99999974E-6 : f32
      %40 = vector.broadcast %cst_22 : f32 to vector<8x1xf32>
      %41 = arith.addf %37, %40 : vector<8x1xf32>
      %42 = math.rsqrt %41 : vector<8x1xf32>
      %43 = vector.broadcast %42 : vector<8x1xf32> to vector<8x32xf32>
      %44 = arith.mulf %39, %43 : vector<8x32xf32>
      %c0_23 = arith.constant 0 : index
      %c0_24 = arith.constant 0 : index
      %45 = vector.load %arg5[%c0_23, %c0_24] : memref<1x32xf32, #tpu.memory_space<vmem>>, vector<1x32xf32>
      %46 = vector.broadcast %45 : vector<1x32xf32> to vector<8x32xf32>
      %47 = arith.mulf %44, %46 : vector<8x32xf32>
      %c0_25 = arith.constant 0 : index
      %c0_26 = arith.constant 0 : index
      %48 = vector.load %arg6[%c0_25, %c0_26] : memref<1x32xf32, #tpu.memory_space<vmem>>, vector<1x32xf32>
      %49 = vector.broadcast %48 : vector<1x32xf32> to vector<8x32xf32>
      %50 = arith.addf %47, %49 : vector<8x32xf32>
      %51 = arith.truncf %50 : vector<8x32xf32> to vector<8x32xbf16>
      %c0_27 = arith.constant 0 : index
      %c0_28 = arith.constant 0 : index
      %52 = vector.load %arg10[%c0_27, %c0_28] : memref<8x32xbf16, #tpu.memory_space<vmem>>, vector<8x32xbf16>
      tpu.vector_store %arg10[%c0_27, %c0_28], %51 {strides = array<i32>} : memref<8x32xbf16, #tpu.memory_space<vmem>>, vector<8x32xbf16>,
    } else {
    }
    %c0 = arith.constant 0 : index
    %c0_1 = arith.constant 0 : index
    %3 = vector.load %arg10[%c0, %c0_1] : memref<8x32xbf16, #tpu.memory_space<vmem>>, vector<8x32xbf16>
    %c0_2 = arith.constant 0 : index
    %c0_3 = arith.constant 0 : index
    %4 = vector.load %arg7[%c0_2, %c0_3] : memref<32x256xbf16, #tpu.memory_space<vmem>>, vector<32x256xbf16>
    %cst = arith.constant dense<0.000000e+00> : vector<8x256xf32>
    %5 = tpu.matmul %3, %4, %cst {dimension_numbers = #tpu.dot_dimension_numbers<[1], [0], [0], [1], [0, 0, 1, 1], [], []>} : vector<8x32xbf16>, vector<32x256xbf16>, vector<8x256xf32> -> vector<8x256xf32>
    %c0_4 = arith.constant 0 : index
    %c0_5 = arith.constant 0 : index
    %6 = vector.load %arg8[%c0_4, %c0_5] : memref<1x256xf32, #tpu.memory_space<vmem>>, vector<1x256xf32>
    %7 = vector.broadcast %6 : vector<1x256xf32> to vector<8x256xf32>
    %8 = arith.addf %5, %7 : vector<8x256xf32>
    %c0_6 = arith.constant 0 : index
    %c0_7 = arith.constant 0 : index
    %9 = vector.load %arg9[%c0_6, %c0_7] : memref<8x256xf32, #tpu.memory_space<vmem>>, vector<8x256xf32>
    tpu.vector_store %arg9[%c0_6, %c0_7], %8 {strides = array<i32>} : memref<8x256xf32, #tpu.memory_space<vmem>>, vector<8x256xf32>,
    return
  }
  func.func @transform_0(%arg0: i32, %arg1: i32) -> (i32, i32) {
    %c0_i32 = arith.constant 0 : i32
    %c0_i32_0 = arith.constant 0 : i32
    return %arg0, %c0_i32 : i32, i32
  }
  func.func @transform_1(%arg0: i32, %arg1: i32) -> (i32, i32) {
    %c0_i32 = arith.constant 0 : i32
    %c0_i32_0 = arith.constant 0 : i32
    %c0_i32_1 = arith.constant 0 : i32
    return %c0_i32, %c0_i32_0 : i32, i32
  }
  func.func @transform_2(%arg0: i32, %arg1: i32) -> (i32, i32) {
    %c0_i32 = arith.constant 0 : i32
    %c0_i32_0 = arith.constant 0 : i32
    %c0_i32_1 = arith.constant 0 : i32
    return %c0_i32, %c0_i32_0 : i32, i32
  }
  func.func @transform_3(%arg0: i32, %arg1: i32) -> (i32, i32) {
    %c0_i32 = arith.constant 0 : i32
    %c0_i32_0 = arith.constant 0 : i32
    %c0_i32_1 = arith.constant 0 : i32
    return %c0_i32, %c0_i32_0 : i32, i32
  }
  func.func @transform_4(%arg0: i32, %arg1: i32) -> (i32, i32) {
    %c0_i32 = arith.constant 0 : i32
    %c0_i32_0 = arith.constant 0 : i32
    %c0_i32_1 = arith.constant 0 : i32
    return %c0_i32, %c0_i32_0 : i32, i32
  }
  func.func @transform_5(%arg0: i32, %arg1: i32) -> (i32, i32) {
    %c0_i32 = arith.constant 0 : i32
    %c0_i32_0 = arith.constant 0 : i32
    return %c0_i32, %arg1 : i32, i32
  }
  func.func @transform_6(%arg0: i32, %arg1: i32) -> (i32, i32) {
    %c0_i32 = arith.constant 0 : i32
    %c0_i32_0 = arith.constant 0 : i32
    return %c0_i32, %arg1 : i32, i32
  }
  func.func @transform_7(%arg0: i32, %arg1: i32) -> (i32, i32) {
    %c0_i32 = arith.constant 0 : i32
    return %arg0, %arg1 : i32, i32
  }
}

module attributes {stable_mosaic.version = 11 : i64} {
  func.func @lm_head_kernel(%arg0: i32, %arg1: i32, %arg2: memref<8x32xf32, #tpu.memory_space<vmem>>, %arg3: memref<32x32xbf16, #tpu.memory_space<vmem>>, %arg4: memref<1x32xf32, #tpu.memory_space<vmem>>, %arg5: memref<1x32xf32, #tpu.memory_space<vmem>>, %arg6: memref<1x32xf32, #tpu.memory_space<vmem>>, %arg7: memref<32x256xbf16, #tpu.memory_space<vmem>>, %arg8: memref<1x256xf32, #tpu.memory_space<vmem>>, %arg9: memref<8x256xf32, #tpu.memory_space<vmem>>, %arg10: memref<8x32xbf16, #tpu.memory_space<vmem>>) attributes {dimension_semantics = [#tpu.dimension_semantics<parallel>, #tpu.dimension_semantics<arbitrary>], iteration_bounds = array<i64: 2, 1>, scalar_prefetch = 0 : i64, scratch_operands = 1 : i64, tpu.core_type = #tpu.core_type<tc>, window_params = [{transform_indices = @transform_0, window_bounds = array<i64: 8, 32>}, {pipeline_mode = #tpu.pipeline_mode<synchronous>, transform_indices = @transform_1, window_bounds = array<i64: 32, 32>}, {pipeline_mode = #tpu.pipeline_mode<synchronous>, transform_indices = @transform_2, window_bounds = array<i64: 1, 32>}, {pipeline_mode = #tpu.pipeline_mode<synchronous>, transform_indices = @transform_3, window_bounds = array<i64: 1, 32>}, {pipeline_mode = #tpu.pipeline_mode<synchronous>, transform_indices = @transform_4, window_bounds = array<i64: 1, 32>}, {transform_indices = @transform_5, window_bounds = array<i64: 32, 256>}, {transform_indices = @transform_6, window_bounds = array<i64: 1, 256>}, {transform_indices = @transform_7, window_bounds = array<i64: 8, 256>}]} {
    %c0_i32 = arith.constant 0 : i32
    %0 = arith.cmpi eq, %arg1, %c0_i32 : i32
    %1 = arith.extui %0 : i1 to i32
    %c0_i32_0 = arith.constant 0 : i32
    %2 = arith.cmpi ne, %1, %c0_i32_0 : i32
    scf.if %2 {
      %c0_8 = arith.constant 0 : index
      %c0_9 = arith.constant 0 : index
      %10 = vector.load %arg2[%c0_8, %c0_9] : memref<8x32xf32, #tpu.memory_space<vmem>>, vector<8x32xf32>
      %11 = arith.truncf %10 : vector<8x32xf32> to vector<8x32xbf16>
      %c0_10 = arith.constant 0 : index
      %c0_11 = arith.constant 0 : index
      %12 = vector.load %arg3[%c0_10, %c0_11] : memref<32x32xbf16, #tpu.memory_space<vmem>>, vector<32x32xbf16>
      %cst_12 = arith.constant dense<0.000000e+00> : vector<8x32xf32>
      %13 = tpu.matmul %11, %12, %cst_12 {dimension_numbers = #tpu.dot_dimension_numbers<[1], [0], [0], [1], [0, 0, 1, 1], [], []>} : vector<8x32xbf16>, vector<32x32xbf16>, vector<8x32xf32> -> vector<8x32xf32>
      %c0_13 = arith.constant 0 : index
      %c0_14 = arith.constant 0 : index
      %14 = vector.load %arg4[%c0_13, %c0_14] : memref<1x32xf32, #tpu.memory_space<vmem>>, vector<1x32xf32>
      %15 = vector.broadcast %14 : vector<1x32xf32> to vector<8x32xf32>
      %16 = arith.addf %13, %15 : vector<8x32xf32>
      %cst_15 = arith.constant 5.000000e-01 : f32
      %17 = vector.broadcast %cst_15 : f32 to vector<8x32xf32>
      %18 = arith.mulf %16, %17 : vector<8x32xf32>
      %cst_16 = arith.constant 0.707106769 : f32
      %19 = vector.broadcast %cst_16 : f32 to vector<8x32xf32>
      %20 = arith.mulf %16, %19 : vector<8x32xf32>
      %21 = math.erf %20 : vector<8x32xf32>
      %cst_17 = arith.constant 1.000000e+00 : f32
      %22 = vector.broadcast %cst_17 : f32 to vector<8x32xf32>
      %23 = arith.addf %22, %21 : vector<8x32xf32>
      %24 = arith.mulf %18, %23 : vector<8x32xf32>
      %cst_18 = arith.constant dense<0.000000e+00> : vector<8xf32>
      %25 = vector.multi_reduction <add>, %24, %cst_18 [1] : vector<8x32xf32> to vector<8xf32>
      %26 = vector.shape_cast %25 : vector<8xf32> to vector<8x1xf32>
      %cst_19 = arith.constant 3.200000e+01 : f32
      %27 = vector.broadcast %cst_19 : f32 to vector<8x1xf32>
      %28 = arith.divf %26, %27 : vector<8x1xf32>
      %29 = vector.broadcast %28 : vector<8x1xf32> to vector<8x32xf32>
      %30 = arith.subf %24, %29 : vector<8x32xf32>
      %31 = vector.broadcast %28 : vector<8x1xf32> to vector<8x32xf32>
      %32 = arith.subf %24, %31 : vector<8x32xf32>
      %33 = arith.mulf %30, %32 : vector<8x32xf32>
      %cst_20 = arith.constant dense<0.000000e+00> : vector<8xf32>
      %34 = vector.multi_reduction <add>, %33, %cst_20 [1] : vector<8x32xf32> to vector<8xf32>
      %35 = vector.shape_cast %34 : vector<8xf32> to vector<8x1xf32>
      %cst_21 = arith.constant 3.200000e+01 : f32
      %36 = vector.broadcast %cst_21 : f32 to vector<8x1xf32>
      %37 = arith.divf %35, %36 : vector<8x1xf32>
      %38 = vector.broadcast %28 : vector<8x1xf32> to vector<8x32xf32>
      %39 = arith.subf %24, %38 : vector<8x32xf32>
      %cst_22 = arith.constant 9.99999974E-6 : f32
      %40 = vector.broadcast %cst_22 : f32 to vector<8x1xf32>
      %41 = arith.addf %37, %40 : vector<8x1xf32>
      %42 = math.rsqrt %41 : vector<8x1xf32>
      %43 = vector.broadcast %42 : vector<8x1xf32> to vector<8x32xf32>
      %44 = arith.mulf %39, %43 : vector<8x32xf32>
      %c0_23 = arith.constant 0 : index
      %c0_24 = arith.constant 0 : index
      %45 = vector.load %arg5[%c0_23, %c0_24] : memref<1x32xf32, #tpu.memory_space<vmem>>, vector<1x32xf32>
      %46 = vector.broadcast %45 : vector<1x32xf32> to vector<8x32xf32>
      %47 = arith.mulf %44, %46 : vector<8x32xf32>
      %c0_25 = arith.constant 0 : index
      %c0_26 = arith.constant 0 : index
      %48 = vector.load %arg6[%c0_25, %c0_26] : memref<1x32xf32, #tpu.memory_space<vmem>>, vector<1x32xf32>
      %49 = vector.broadcast %48 : vector<1x32xf32> to vector<8x32xf32>
      %50 = arith.addf %47, %49 : vector<8x32xf32>
      %51 = arith.truncf %50 : vector<8x32xf32> to vector<8x32xbf16>
      %c0_27 = arith.constant 0 : index
      %c0_28 = arith.constant 0 : index
      %52 = vector.load %arg10[%c0_27, %c0_28] : memref<8x32xbf16, #tpu.memory_space<vmem>>, vector<8x32xbf16>
      tpu.vector_store %arg10[%c0_27, %c0_28], %51 {strides = array<i32>} : memref<8x32xbf16, #tpu.memory_space<vmem>>, vector<8x32xbf16>,
    } else {
    }
    %c0 = arith.constant 0 : index
    %c0_1 = arith.constant 0 : index
    %3 = vector.load %arg10[%c0, %c0_1] : memref<8x32xbf16, #tpu.memory_space<vmem>>, vector<8x32xbf16>
    %c0_2 = arith.constant 0 : index
    %c0_3 = arith.constant 0 : index
    %4 = vector.load %arg7[%c0_2, %c0_3] : memref<32x256xbf16, #tpu.memory_space<vmem>>, vector<32x256xbf16>
    %cst = arith.constant dense<0.000000e+00> : vector<8x256xf32>
    %5 = tpu.matmul %3, %4, %cst {dimension_numbers = #tpu.dot_dimension_numbers<[1], [0], [0], [1], [0, 0, 1, 1], [], []>} : vector<8x32xbf16>, vector<32x256xbf16>, vector<8x256xf32> -> vector<8x256xf32>
    %c0_4 = arith.constant 0 : index
    %c0_5 = arith.constant 0 : index
    %6 = vector.load %arg8[%c0_4, %c0_5] : memref<1x256xf32, #tpu.memory_space<vmem>>, vector<1x256xf32>
    %7 = vector.broadcast %6 : vector<1x256xf32> to vector<8x256xf32>
    %8 = arith.addf %5, %7 : vector<8x256xf32>
    %c0_6 = arith.constant 0 : index
    %c0_7 = arith.constant 0 : index
    %9 = vector.load %arg9[%c0_6, %c0_7] : memref<8x256xf32, #tpu.memory_space<vmem>>, vector<8x256xf32>
    tpu.vector_store %arg9[%c0_6, %c0_7], %8 {strides = array<i32>} : memref<8x256xf32, #tpu.memory_space<vmem>>, vector<8x256xf32>,
    return
  }
  func.func @transform_0(%arg0: i32, %arg1: i32) -> (i32, i32) {
    %c0_i32 = arith.constant 0 : i32
    %c0_i32_0 = arith.constant 0 : i32
    return %arg0, %c0_i32 : i32, i32
  }
  func.func @transform_1(%arg0: i32, %arg1: i32) -> (i32, i32) {
    %c0_i32 = arith.constant 0 : i32
    %c0_i32_0 = arith.constant 0 : i32
    %c0_i32_1 = arith.constant 0 : i32
    return %c0_i32, %c0_i32_0 : i32, i32
  }
  func.func @transform_2(%arg0: i32, %arg1: i32) -> (i32, i32) {
    %c0_i32 = arith.constant 0 : i32
    %c0_i32_0 = arith.constant 0 : i32
    %c0_i32_1 = arith.constant 0 : i32
    return %c0_i32, %c0_i32_0 : i32, i32
  }
  func.func @transform_3(%arg0: i32, %arg1: i32) -> (i32, i32) {
    %c0_i32 = arith.constant 0 : i32
    %c0_i32_0 = arith.constant 0 : i32
    %c0_i32_1 = arith.constant 0 : i32
    return %c0_i32, %c0_i32_0 : i32, i32
  }
  func.func @transform_4(%arg0: i32, %arg1: i32) -> (i32, i32) {
    %c0_i32 = arith.constant 0 : i32
    %c0_i32_0 = arith.constant 0 : i32
    %c0_i32_1 = arith.constant 0 : i32
    return %c0_i32, %c0_i32_0 : i32, i32
  }
  func.func @transform_5(%arg0: i32, %arg1: i32) -> (i32, i32) {
    %c0_i32 = arith.constant 0 : i32
    %c0_i32_0 = arith.constant 0 : i32
    return %c0_i32, %arg1 : i32, i32
  }
  func.func @transform_6(%arg0: i32, %arg1: i32) -> (i32, i32) {
    %c0_i32 = arith.constant 0 : i32
    %c0_i32_0 = arith.constant 0 : i32
    return %c0_i32, %arg1 : i32, i32
  }
  func.func @transform_7(%arg0: i32, %arg1: i32) -> (i32, i32) {
    %c0_i32 = arith.constant 0 : i32
    return %arg0, %arg1 : i32, i32
  }
}

</mosaic_0001>

<llo_original>
// kernel: tpu_custom_call.1
$region0: #{tpu_custom_call.1}
  #allocation0 [shape = 'u32[]', space=smem, size = 0x4, offset = 0x4, fixed_abs, tag = 'smem constant byte address 0x4 - core index']
  #allocation1 [shape = 'u32[144,128]{1,0:T(1,128)}', space=vmem, size = 0x12000, scoped, tag = 'internal scratch']
  #allocation2 [shape = 'bf16[8,32]{1,0:T(8,128)(2,1)}', space=vmem, size = 0x800, scoped, tag = 'scratch operand']
  %s0 = inlined_call_operand.hbm [shape: f32[16,32], index: 0, kind: input, shape index: {}]
  %s1 = inlined_call_operand.hbm [shape: bf16[32,32], index: 1, kind: input, shape index: {}]
  %s2 = inlined_call_operand.vmem [shape: f32[1,32], index: 2, kind: input, shape index: {}]
  %s3 = inlined_call_operand.vmem [shape: f32[1,32], index: 3, kind: input, shape index: {}]
  %s4 = inlined_call_operand.vmem [shape: f32[1,32], index: 4, kind: input, shape index: {}]
  %s5 = inlined_call_operand.hbm [shape: bf16[32,256], index: 5, kind: input, shape index: {}]
  %s6 = inlined_call_operand.vmem [shape: f32[1,256], index: 6, kind: input, shape index: {}]
  %s7 = inlined_call_operand.hbm [shape: f32[16,256], index: 7, kind: output, shape index: {}]
  %s8 = sld [smem:[#allocation0]]
  $region77: #{tpu_custom_call.1} parent=0
    _
  %s10 = ssub.s32 1, %s8
  %s11 = scalar_select 0, %s10, %s8
  $region1: #{tpu_custom_call.1} parent=0
    #allocation3 [shape = 'u8[4096]{0}', space=vmem, size = 0x1000, scoped, tag = 'input window, operand 0, single buffered']
    #allocation4 [shape = 's32[2]{0}', space=sflag, size = 0x8, scoped, tag = 'scoped memory for tpu_custom_call.1']
    #allocation5 [shape = 's32[2]{0}', space=sflag, size = 0x8, scoped, tag = 'scoped memory for tpu_custom_call.1']
    #allocation6 [shape = 'u8[8192]{0}', space=vmem, size = 0x2000, scoped, tag = 'input window, operand 1, single buffered']
    #allocation7 [shape = 's32[1]{0}', space=sflag, size = 0x4, scoped, tag = 'scoped memory for tpu_custom_call.1']
    #allocation8 [shape = 'u8[16384]{0}', space=vmem, size = 0x4000, scoped, tag = 'input window, operand 5, single buffered']
    #allocation9 [shape = 'u8[16384]{0}', space=vmem, size = 0x4000, scoped, tag = 'output window, operand 0']
    %12 = vsyncpa [#allocation4], 0
    %13 = vsyncpa [#allocation7], 0
    %14 = vsyncpa [#allocation5], 0
    %s15 = scalar_lea.sflag [#allocation5], 1
    %16 = vsyncpa %s15, 0
    loop: start=0, step=1, limit=4
    $region2: #{tpu_custom_call.1} parent=1 // loop_pre_header
      _
    $region3: #{tpu_custom_call.1} parent=1 // loop_header
      %s18 = sphi 0, %s22
      %p19 = scmp.ge.s32.totalorder %s18, 4
      %s25 = sphi 0, %s37
      %s26 = sphi 0, %s33
      %s27 = sphi 0, %s25
      %s28 = sphi 0, %s26
      %s29 = sphi 0, %s27
      %s30 = sphi 0, %s28
      %s40 = sphi 0, %s42
      %s43 = sphi 0, %s40
      %s44 = sphi 0, %s43
      %s60 = sphi 0, %s44
      %s64 = sphi 0, %s64
      %s66 = sphi 0, %s64
      %s67 = sphi 0, %s66
      %s81 = sphi 0, %s67
      %s85 = sphi 0, %s85
      %s87 = sphi 0, %s85
      %s88 = sphi 0, %s87
      %s102 = sphi 0, %s88
      %s106 = sphi 0, %s106
      %s108 = sphi 0, %s106
      %s109 = sphi 0, %s108
      %s123 = sphi 0, %s109
      %s127 = sphi 0, %s127
      %s129 = sphi 0, %s127
      %s130 = sphi 0, %s129
      %s144 = sphi 0, %s130
      %s150 = sphi 0, %s152
      %s153 = sphi 0, %s150
      %s154 = sphi 0, %s153
      %s170 = sphi 0, %s154
      %s176 = sphi 0, %s178
      %s179 = sphi 0, %s176
      %s180 = sphi 0, %s179
      %s196 = sphi 0, %s180
      %s204 = sphi 0, %s206
      %s207 = sphi 0, %s204
      %s208 = sphi 0, %s207
      %s224 = sphi 0, %s208
    $region4: #{tpu_custom_call.1} parent=1 // loop_header_branch
      %21 = sbr.rel (%p19) target = $region8
    $region5: #{tpu_custom_call.1} parent=1 // loop_body
      %s23 = ssub.s32 %s18, 1
      %s24 = ssub.s32 %s18, 2
      %s31 = sadd.s32 1, %s26
      %p32 = scmp.ge.s32.totalorder %s31, 1
      %s33 = scalar_select %p32, 0, %s31
      %s34 = sadd.s32 1, %s25
      %s35 = scalar_select %p32, %s34, %s25
      %p36 = scmp.ge.s32.totalorder %s35, 2
      %s37 = scalar_select %p36, 0, %s35
      %s38 = ssub.s32 %s25, %s37
      %p39 = scmp.eq.s32.totalorder %s38, 0
      %s41 = sadd.s32 %s40, 1
      %s42 = scalar_select %p39, %s40, %s41
      %p45 = pneg %p39
      %p46 = scmp.eq.s32.totalorder %s18, 1
      %p47 = por %p45, %p46
      %p48 = scmp.ne.s32.totalorder %s40, %s43
      %p49 = scmp.eq.s32.totalorder %s18, 0
      %p50 = por %p48, %p49
      %p51 = scmp.ne.s32.totalorder %s40, %s43
      %p52 = scmp.eq.s32.totalorder %s23, 1
      %p53 = por %p51, %p52
      %p54 = scmp.ne.s32.totalorder %s43, %s44
      %p55 = scmp.eq.s32.totalorder %s23, 0
      %p56 = por %p54, %p55
      %p57 = scmp.ne.s32.totalorder %s43, %s44
      %p58 = scmp.eq.s32.totalorder %s24, 1
      %p59 = por %p57, %p58
      %p61 = scmp.ne.s32.totalorder %s44, %s60
      %p62 = scmp.eq.s32.totalorder %s24, 0
      %p63 = por %p61, %p62
      %s65 = sadd.s32 %s64, 1
      %p68 = scmp.eq.s32.totalorder %s18, 1
      %p69 = scmp.ne.s32.totalorder %s64, %s66
      %p70 = scmp.eq.s32.totalorder %s18, 0
      %p71 = por %p69, %p70
      %p72 = scmp.ne.s32.totalorder %s64, %s66
      %p73 = scmp.eq.s32.totalorder %s23, 1
      %p74 = por %p72, %p73
      %p75 = scmp.ne.s32.totalorder %s66, %s67
      %p76 = scmp.eq.s32.totalorder %s23, 0
      %p77 = por %p75, %p76
      %p78 = scmp.ne.s32.totalorder %s66, %s67
      %p79 = scmp.eq.s32.totalorder %s24, 1
      %p80 = por %p78, %p79
      %p82 = scmp.ne.s32.totalorder %s67, %s81
      %p83 = scmp.eq.s32.totalorder %s24, 0
      %p84 = por %p82, %p83
      %s86 = sadd.s32 %s85, 1
      %p89 = scmp.eq.s32.totalorder %s18, 1
      %p90 = scmp.ne.s32.totalorder %s85, %s87
      %p91 = scmp.eq.s32.totalorder %s18, 0
      %p92 = por %p90, %p91
      %p93 = scmp.ne.s32.totalorder %s85, %s87
      %p94 = scmp.eq.s32.totalorder %s23, 1
      %p95 = por %p93, %p94
      %p96 = scmp.ne.s32.totalorder %s87, %s88
      %p97 = scmp.eq.s32.totalorder %s23, 0
      %p98 = por %p96, %p97
      %p99 = scmp.ne.s32.totalorder %s87, %s88
      %p100 = scmp.eq.s32.totalorder %s24, 1
      %p101 = por %p99, %p100
      %p103 = scmp.ne.s32.totalorder %s88, %s102
      %p104 = scmp.eq.s32.totalorder %s24, 0
      %p105 = por %p103, %p104
      %s107 = sadd.s32 %s106, 1
      %p110 = scmp.eq.s32.totalorder %s18, 1
      %p111 = scmp.ne.s32.totalorder %s106, %s108
      %p112 = scmp.eq.s32.totalorder %s18, 0
      %p113 = por %p111, %p112
      %p114 = scmp.ne.s32.totalorder %s106, %s108
      %p115 = scmp.eq.s32.totalorder %s23, 1
      %p116 = por %p114, %p115
      %p117 = scmp.ne.s32.totalorder %s108, %s109
      %p118 = scmp.eq.s32.totalorder %s23, 0
      %p119 = por %p117, %p118
      %p120 = scmp.ne.s32.totalorder %s108, %s109
      %p121 = scmp.eq.s32.totalorder %s24, 1
      %p122 = por %p120, %p121
      %p124 = scmp.ne.s32.totalorder %s109, %s123
      %p125 = scmp.eq.s32.totalorder %s24, 0
      %p126 = por %p124, %p125
      %s128 = sadd.s32 %s127, 1
      %p131 = scmp.eq.s32.totalorder %s18, 1
      %p132 = scmp.ne.s32.totalorder %s127, %s129
      %p133 = scmp.eq.s32.totalorder %s18, 0
      %p134 = por %p132, %p133
      %p135 = scmp.ne.s32.totalorder %s127, %s129
      %p136 = scmp.eq.s32.totalorder %s23, 1
      %p137 = por %p135, %p136
      %p138 = scmp.ne.s32.totalorder %s129, %s130
      %p139 = scmp.eq.s32.totalorder %s23, 0
      %p140 = por %p138, %p139
      %p141 = scmp.ne.s32.totalorder %s129, %s130
      %p142 = scmp.eq.s32.totalorder %s24, 1
      %p143 = por %p141, %p142
      %p145 = scmp.ne.s32.totalorder %s130, %s144
      %p146 = scmp.eq.s32.totalorder %s24, 0
      %p147 = por %p145, %p146
      %s148 = ssub.s32 %s26, %s33
      %p149 = scmp.eq.s32.totalorder %s148, 0
      %s151 = sadd.s32 %s150, 1
      %s152 = scalar_select %p149, %s150, %s151
      %p155 = pneg %p149
      %p156 = scmp.eq.s32.totalorder %s18, 1
      %p157 = por %p155, %p156
      %p158 = scmp.ne.s32.totalorder %s150, %s153
      %p159 = scmp.eq.s32.totalorder %s18, 0
      %p160 = por %p158, %p159
      %p161 = scmp.ne.s32.totalorder %s150, %s153
      %p162 = scmp.eq.s32.totalorder %s23, 1
      %p163 = por %p161, %p162
      %p164 = scmp.ne.s32.totalorder %s153, %s154
      %p165 = scmp.eq.s32.totalorder %s23, 0
      %p166 = por %p164, %p165
      %p167 = scmp.ne.s32.totalorder %s153, %s154
      %p168 = scmp.eq.s32.totalorder %s24, 1
      %p169 = por %p167, %p168
      %p171 = scmp.ne.s32.totalorder %s154, %s170
      %p172 = scmp.eq.s32.totalorder %s24, 0
      %p173 = por %p171, %p172
      %s174 = ssub.s32 %s26, %s33
      %p175 = scmp.eq.s32.totalorder %s174, 0
      %s177 = sadd.s32 %s176, 1
      %s178 = scalar_select %p175, %s176, %s177
      %p181 = pneg %p175
      %p182 = scmp.eq.s32.totalorder %s18, 1
      %p183 = por %p181, %p182
      %p184 = scmp.ne.s32.totalorder %s176, %s179
      %p185 = scmp.eq.s32.totalorder %s18, 0
      %p186 = por %p184, %p185
      %p187 = scmp.ne.s32.totalorder %s176, %s179
      %p188 = scmp.eq.s32.totalorder %s23, 1
      %p189 = por %p187, %p188
      %p190 = scmp.ne.s32.totalorder %s179, %s180
      %p191 = scmp.eq.s32.totalorder %s23, 0
      %p192 = por %p190, %p191
      %p193 = scmp.ne.s32.totalorder %s179, %s180
      %p194 = scmp.eq.s32.totalorder %s24, 1
      %p195 = por %p193, %p194
      %p197 = scmp.ne.s32.totalorder %s180, %s196
      %p198 = scmp.eq.s32.totalorder %s24, 0
      %p199 = por %p197, %p198
      %s200 = ssub.s32 %s25, %s37
      %s201 = ssub.s32 %s26, %s33
      %s202 = sor.u32 %s200, %s201
      %p203 = scmp.eq.s32.totalorder %s202, 0
      %s205 = sadd.s32 %s204, 1
      %s206 = scalar_select %p203, %s204, %s205
      %p209 = pneg %p203
      %p210 = scmp.eq.s32.totalorder %s18, 1
      %p211 = por %p209, %p210
      %p212 = scmp.ne.s32.totalorder %s204, %s207
      %p213 = scmp.eq.s32.totalorder %s18, 0
      %p214 = por %p212, %p213
      %p215 = scmp.ne.s32.totalorder %s204, %s207
      %p216 = scmp.eq.s32.totalorder %s23, 1
      %p217 = por %p215, %p216
      %p218 = scmp.ne.s32.totalorder %s207, %s208
      %p219 = scmp.eq.s32.totalorder %s23, 0
      %p220 = por %p218, %p219
      %p221 = scmp.ne.s32.totalorder %s207, %s208
      %p222 = scmp.eq.s32.totalorder %s24, 1
      %p223 = por %p221, %p222
      %p225 = scmp.ne.s32.totalorder %s208, %s224
      %p226 = scmp.eq.s32.totalorder %s24, 0
      %p227 = por %p225, %p226
      %p228 = scmp.le.s32.totalorder 1, %s18
      %p229 = scmp.lt.s32.totalorder %s18, 3
      %p230 = pnand %p228, %p229
      %p231 = pneg %p230
      // Predicated region
      $region9: #{tpu_custom_call.1} parent=5 // pred_check
        _
      $region10: #{tpu_custom_call.1} parent=5 // pred_check_branch
        %233 = sbr.rel (%p230) target = $region12
      $region11: #{tpu_custom_call.1} parent=5 // pred_region
        %s234 = ssub.s32 %s18, 1
        // Predicated region
        $region13: #{tpu_custom_call.1} parent=11 // pred_check
          %p235 = pneg %p56
        $region14: #{tpu_custom_call.1} parent=11 // pred_check_branch
          %237 = sbr.rel (%p235) target = $region16
        $region15: #{tpu_custom_call.1} parent=11 // pred_region
          %s239 = ssub.s32 128, 128
          %240 = vsyncadd [#allocation4], %s239
          %s241 = smul.addr %s27, 128
          %s242 = scalar_lea.hbm %s0, %s241
          %s244 = sshll.u32 [#allocation3], 4
          %s245 = int_to_ptr.vmem [resolvable:$true] %s244
          %247 = dma.hbm_to_vmem [thread:$0]  %s242, 128, %s245, [#allocation4]
        $region16: #{tpu_custom_call.1} parent=11 // pred_fallthru
          _
        // Predicated region
        $region17: #{tpu_custom_call.1} parent=11 // pred_check
          %p248 = pneg %p77
        $region18: #{tpu_custom_call.1} parent=11 // pred_check_branch
          %250 = sbr.rel (%p248) target = $region20
        $region19: #{tpu_custom_call.1} parent=11 // pred_region
          %s252 = ssub.s32 256, 256
          %253 = vsyncadd [#allocation7], %s252
          %s254 = sshll.u32 [#allocation6], 4
          %s255 = int_to_ptr.vmem [resolvable:$true] %s254
          %260 = dma.hbm_to_vmem [thread:$0]  %s1, 256, %s255, [#allocation7], 64, 64, 4
        $region20: #{tpu_custom_call.1} parent=11 // pred_fallthru
          _
        // Predicated region
        $region21: #{tpu_custom_call.1} parent=11 // pred_check
          %p261 = pneg %p98
        $region22: #{tpu_custom_call.1} parent=11 // pred_check_branch
          %263 = sbr.rel (%p261) target = $region24
        $region23: #{tpu_custom_call.1} parent=11 // pred_region
          _
        $region24: #{tpu_custom_call.1} parent=11 // pred_fallthru
          _
        // Predicated region
        $region25: #{tpu_custom_call.1} parent=11 // pred_check
          %p264 = pneg %p119
        $region26: #{tpu_custom_call.1} parent=11 // pred_check_branch
          %266 = sbr.rel (%p264) target = $region28
        $region27: #{tpu_custom_call.1} parent=11 // pred_region
          _
        $region28: #{tpu_custom_call.1} parent=11 // pred_fallthru
          _
        // Predicated region
        $region29: #{tpu_custom_call.1} parent=11 // pred_check
          %p267 = pneg %p140
        $region30: #{tpu_custom_call.1} parent=11 // pred_check_branch
          %269 = sbr.rel (%p267) target = $region32
        $region31: #{tpu_custom_call.1} parent=11 // pred_region
          _
        $region32: #{tpu_custom_call.1} parent=11 // pred_fallthru
          _
        // Predicated region
        $region33: #{tpu_custom_call.1} parent=11 // pred_check
          %p270 = pneg %p166
        $region34: #{tpu_custom_call.1} parent=11 // pred_check_branch
          %272 = sbr.rel (%p270) target = $region36
        $region35: #{tpu_custom_call.1} parent=11 // pred_region
          %s273 = smul.u32 2, %s28
          %s275 = ssub.s32 512, 512
          %276 = vsyncadd [#allocation7], %s275
          %s277 = smul.addr %s273, 64
          %s278 = scalar_lea.hbm %s5, %s277
          %s279 = sshll.u32 [#allocation8], 4
          %s280 = int_to_ptr.vmem [resolvable:$true] %s279
          %285 = dma.hbm_to_vmem [thread:$0]  %s278, 512, %s280, [#allocation7], 128, 128, 8
        $region36: #{tpu_custom_call.1} parent=11 // pred_fallthru
          _
        // Predicated region
        $region37: #{tpu_custom_call.1} parent=11 // pred_check
          %p286 = pneg %p192
        $region38: #{tpu_custom_call.1} parent=11 // pred_check_branch
          %288 = sbr.rel (%p286) target = $region40
        $region39: #{tpu_custom_call.1} parent=11 // pred_region
          %s289 = smul.u32 2, %s28
          %p290 = scmp.lt.s32.totalorder %s289, 1
          %s291 = scalar_select %p290, %s289, 1
          %s292 = scalar_lea.vmem %s6, %s291
          %s293 = smul.u32 2, %s28
        $region40: #{tpu_custom_call.1} parent=11 // pred_fallthru
          _
      $region12: #{tpu_custom_call.1} parent=5 // pred_fallthru
        _
      %p294 = scmp.lt.s32.totalorder %s18, 2
      // Predicated region
      $region41: #{tpu_custom_call.1} parent=5 // pred_check
        %p295 = pneg %p294
      $region42: #{tpu_custom_call.1} parent=5 // pred_check_branch
        %297 = sbr.rel (%p295) target = $region44
      $region43: #{tpu_custom_call.1} parent=5 // pred_region
        _
      $region44: #{tpu_custom_call.1} parent=5 // pred_fallthru
        _
      %p298 = scmp.le.s32.totalorder 1, %s18
      %p299 = scmp.lt.s32.totalorder %s18, 3
      %p300 = pnand %p298, %p299
      %p301 = pneg %p300
      // Predicated region
      $region45: #{tpu_custom_call.1} parent=5 // pred_check
        _
      $region46: #{tpu_custom_call.1} parent=5 // pred_check_branch
        %303 = sbr.rel (%p300) target = $region48
      $region47: #{tpu_custom_call.1} parent=5 // pred_region
        %s304 = ssub.s32 %s18, 1
        // Predicated region
        $region49: #{tpu_custom_call.1} parent=47 // pred_check
          %p305 = pneg %p56
        $region50: #{tpu_custom_call.1} parent=47 // pred_check_branch
          %307 = sbr.rel (%p305) target = $region52
        $region51: #{tpu_custom_call.1} parent=47 // pred_region
          %308 = dma.done [#allocation4], 128
        $region52: #{tpu_custom_call.1} parent=47 // pred_fallthru
          _
        // Predicated region
        $region53: #{tpu_custom_call.1} parent=47 // pred_check
          %p309 = pneg %p77
        $region54: #{tpu_custom_call.1} parent=47 // pred_check_branch
          %311 = sbr.rel (%p309) target = $region56
        $region55: #{tpu_custom_call.1} parent=47 // pred_region
          %312 = dma.done [#allocation7], 256
        $region56: #{tpu_custom_call.1} parent=47 // pred_fallthru
          _
        // Predicated region
        $region57: #{tpu_custom_call.1} parent=47 // pred_check
          %p313 = pneg %p166
        $region58: #{tpu_custom_call.1} parent=47 // pred_check_branch
          %315 = sbr.rel (%p313) target = $region60
        $region59: #{tpu_custom_call.1} parent=47 // pred_region
          %316 = dma.done [#allocation7], 512
        $region60: #{tpu_custom_call.1} parent=47 // pred_fallthru
          _
        %p317 = pneg %p56
        %p318 = pneg %p53
        %p319 = pneg %p77
        %p320 = pneg %p74
        %p321 = pneg %p98
        %p322 = pneg %p95
        %p323 = pneg %p119
        %p324 = pneg %p116
        %p325 = pneg %p140
        %p326 = pneg %p137
        %p327 = pneg %p166
        %p328 = pneg %p163
        %s329 = smul.u32 2, %s28
        %p330 = scmp.lt.s32.totalorder %s329, 1
        %s331 = scalar_select %p330, %s329, 1
        %s332 = scalar_lea.vmem %s6, %s331
        %p333 = pneg %p192
        %p334 = pneg %p189
        %p335 = pneg %p220
        %p336 = pneg %p217
        %s337 = sand.u32 %s207, 1
        %s338 = scalar_lea.sflag [#allocation5], %s337
        %s339 = sand.u32 %s207, 1
        %s340 = smul.addr %s339, 16
        %s341 = scalar_lea.vmem [#allocation9], %s340
        %s342 = smul.u32 2, %s28
        %s343 = smul.u32 2, %s28
        %p344 = scmp.lt.s32.totalorder %s343, 1
        %s345 = scalar_select %p344, %s343, 1
        %s346 = scalar_lea.vmem %s6, %s345
        %s347 = smul.u32 2, %s28
        %s348 = smul.u32 2, %s28
        %p350 = scmp.eq.s32.totalorder %s28, 0
        // Predicated region
        $region61: #{tpu_custom_call.1} parent=47 // pred_check
          %p351 = pneg %p350
        $region62: #{tpu_custom_call.1} parent=47 // pred_check_branch
          %353 = sbr.rel (%p351) target = $region64
        $region63: #{tpu_custom_call.1} parent=47 // pred_region
          %v354 = vld [vmem:[#allocation3] sm:$0xff]
          %v355 = vpack.c.bf16 %v354, %v354
          %v356 = vld [vmem:[#allocation6] sm:$0xf]
          %v357 = vld [vmem:[#allocation6 + $0x4] sm:$0xf]
          %v358 = vld [vmem:[#allocation6 + $0x8] sm:$0xf]
          %v359 = vld [vmem:[#allocation6 + $0xc] sm:$0xf]
          %v360 = vld [vmem:[%s2] sm:$0x1]
          %v362 = vlaneseq
          %v363 = vshrl.u32 %v362, 7
          %v364 = vsub.s32 0, %v363
          %v365 = vrot.slane %v360, %v364
          %v371 = vunpack.c.l.b16 %v356
          %v372 = vunpack.c.l.b16 %v357
          %v373 = vunpack.c.l.b16 %v358
          %v374 = vunpack.c.l.b16 %v359
          %v375 = vpack.c.b16 %v372, %v371
          %v376 = vpack.c.b16 %v374, %v373
          %vm379 = vcmask 261120
          %v381 = vsel %vm379, %v355, 0
          %383 = vmatprep.subr.bf16.mxu0 0
          %384 = vmatpush1.bf16.msra.mxu0 %v375
          %385 = vmatprep.subr.bf16.mxu0 0
          %386 = vmatpush1.bf16.msra.mxu0 %v376
          %387 = vmatprep.subr.bf16.mxu0 0
          %388 = vmatpush1.bf16.msra.mxu0 0
          %389 = vmatprep.subr.bf16.mxu0 0
          %390 = vmatpush1.bf16.msra.mxu0 0
          %391 = vmatprep.subr.bf16.mxu0 0
          %392 = vmatpush1.bf16.msra.mxu0 0
          %393 = vmatprep.subr.bf16.mxu0 0
          %394 = vmatpush1.bf16.msra.mxu0 0
          %395 = vmatprep.subr.bf16.mxu0 0
          %396 = vmatpush1.bf16.msra.mxu0 0
          %397 = vmatprep.subr.bf16.mxu0 0
          %398 = vmatpush1.bf16.msra.mxu0 0
          %399 = vmatprep.subr.bf16.mxu0 0
          %400 = vmatpush1.bf16.msra.mxu0 0
          %401 = vmatprep.subr.bf16.mxu0 0
          %402 = vmatpush1.bf16.msra.mxu0 0
          %403 = vmatprep.subr.bf16.mxu0 0
          %404 = vmatpush1.bf16.msra.mxu0 0
          %405 = vmatprep.subr.bf16.mxu0 0
          %406 = vmatpush1.bf16.msra.mxu0 0
          %407 = vmatprep.subr.bf16.mxu0 0
          %408 = vmatpush1.bf16.msra.mxu0 0
          %409 = vmatprep.subr.bf16.mxu0 0
          %410 = vmatpush1.bf16.msra.mxu0 0
          %411 = vmatprep.subr.bf16.mxu0 0
          %412 = vmatpush1.bf16.msra.mxu0 0
          %413 = vmatprep.subr.bf16.mxu0 0
          %414 = vmatpush1.bf16.msra.mxu0 0
          %415 = vmatprep.mubr.bf16.mxu0 0
          %416 = vmatmul.mubr.bf16.gmra.mrb[0].mxu0 %v381
          %v417 = vpop.f32.mrb[0].mxu0
          %v418 = vadd.f32 %v365, %v417
          %v419 = vpop.f32.mrb[0].mxu0
          %v420 = vpop.f32.mrb[0].mxu0
          %v421 = vpop.f32.mrb[0].mxu0
          %422 = vdwg.mxu0
          %v423 = vmul.f32 %v418, 0.5
          %v424 = vmul.f32 %v418, 0.70710677
          %v425 = verf.f32.pop %v424
          %v426 = vadd.f32 %v425, 1.0
          %v427 = vmul.f32 %v423, %v426
          %v428 = vsel %vm379, %v427, 0.0
          %429 = vadd.xlane.f32.xlu0 %v428
          %v430 = vpop.xlane.xlu0 %429
          %v431 = vrcp.pop 32.0
          %v432 = vmul.f32 %v430, %v431
          %v433 = vsub.f32 %v427, %v432
          %v434 = vmul.f32 %v433, %v433
          %v435 = vsel %vm379, %v434, 0.0
          %436 = vadd.xlane.f32.xlu0 %v435
          %v437 = vpop.xlane.xlu0 %436
          %v438 = vmul.f32 %v437, %v431
          %v439 = vadd.f32 %v438, 1e-05
          %v440 = vrsqrt.pop %v439
          %v441 = vmul.f32 %v433, %v440
          %v442 = vld [vmem:[%s3] sm:$0x1]
          %v444 = vlaneseq
          %v445 = vshrl.u32 %v444, 7
          %v446 = vsub.s32 0, %v445
          %v447 = vrot.slane %v442, %v446
          %v449 = vmul.f32 %v441, %v447
          %v450 = vld [vmem:[%s4] sm:$0x1]
          %v452 = vlaneseq
          %v453 = vshrl.u32 %v452, 7
          %v454 = vsub.s32 0, %v453
          %v455 = vrot.slane %v450, %v454
          %v457 = vadd.f32 %v449, %v455
          %v458 = vpack.c.bf16 %v457, %v457
          %vm459 = vcmask 257024
          %460 = vst.msk [vmem:[#allocation2] sm:$0xf] %vm459, %v458
        $region64: #{tpu_custom_call.1} parent=47 // pred_fallthru
          _
        %v461 = vld [vmem:[#allocation2] sm:$0xf]
        %v462 = vld [vmem:[#allocation8] sm:$0xff]
        %v463 = vld [vmem:[#allocation8 + $0x8] sm:$0xff]
        %v464 = vld [vmem:[#allocation8 + $0x10] sm:$0xff]
        %v465 = vld [vmem:[#allocation8 + $0x18] sm:$0xff]
        %v466 = vld [vmem:[%s346] sm:$0x3]
        %v468 = vlaneseq
        %v469 = vshrl.u32 %v468, 7
        %v470 = vsub.s32 0, %v469
        %v471 = vrot.slane %v466, %v470
        %v472 = vlaneseq
        %v473 = vshrl.u32 %v472, 7
        %v474 = vsub.s32 1, %v473
        %v475 = vrot.slane %v466, %v474
        %v482 = vunpack.c.l.b16 %v462
        %v483 = vunpack.c.h.b16 %v462
        %v484 = vunpack.c.l.b16 %v463
        %v485 = vunpack.c.h.b16 %v463
        %v486 = vunpack.c.l.b16 %v464
        %v487 = vunpack.c.h.b16 %v464
        %v488 = vunpack.c.l.b16 %v465
        %v489 = vunpack.c.h.b16 %v465
        %v490 = vpack.c.b16 %v484, %v482
        %v491 = vpack.c.b16 %v485, %v483
        %v492 = vpack.c.b16 %v488, %v486
        %v493 = vpack.c.b16 %v489, %v487
        %vm498 = vcmask 261120
        %v500 = vsel %vm498, %v461, 0
        %502 = vmatprep.subr.bf16.mxu0 %v491
        %503 = vmatpush1.bf16.msra.mxu0 %v490
        %504 = vmatprep.subr.bf16.mxu0 %v493
        %505 = vmatpush1.bf16.msra.mxu0 %v492
        %506 = vmatprep.subr.bf16.mxu0 0
        %507 = vmatpush1.bf16.msra.mxu0 0
        %508 = vmatprep.subr.bf16.mxu0 0
        %509 = vmatpush1.bf16.msra.mxu0 0
        %510 = vmatprep.subr.bf16.mxu0 0
        %511 = vmatpush1.bf16.msra.mxu0 0
        %512 = vmatprep.subr.bf16.mxu0 0
        %513 = vmatpush1.bf16.msra.mxu0 0
        %514 = vmatprep.subr.bf16.mxu0 0
        %515 = vmatpush1.bf16.msra.mxu0 0
        %516 = vmatprep.subr.bf16.mxu0 0
        %517 = vmatpush1.bf16.msra.mxu0 0
        %518 = vmatprep.subr.bf16.mxu0 0
        %519 = vmatpush1.bf16.msra.mxu0 0
        %520 = vmatprep.subr.bf16.mxu0 0
        %521 = vmatpush1.bf16.msra.mxu0 0
        %522 = vmatprep.subr.bf16.mxu0 0
        %523 = vmatpush1.bf16.msra.mxu0 0
        %524 = vmatprep.subr.bf16.mxu0 0
        %525 = vmatpush1.bf16.msra.mxu0 0
        %526 = vmatprep.subr.bf16.mxu0 0
        %527 = vmatpush1.bf16.msra.mxu0 0
        %528 = vmatprep.subr.bf16.mxu0 0
        %529 = vmatpush1.bf16.msra.mxu0 0
        %530 = vmatprep.subr.bf16.mxu0 0
        %531 = vmatpush1.bf16.msra.mxu0 0
        %532 = vmatprep.subr.bf16.mxu0 0
        %533 = vmatpush1.bf16.msra.mxu0 0
        %534 = vmatprep.mubr.bf16.mxu0 0
        %535 = vmatmul.mubr.bf16.gmra.mrb[0].mxu0 %v500
        %v536 = vpop.f32.mrb[0].mxu0
        %v537 = vadd.f32 %v471, %v536
        %v538 = vpop.f32.mrb[0].mxu0
        %v539 = vadd.f32 %v475, %v538
        %v540 = vpop.f32.mrb[0].mxu0
        %v541 = vpop.f32.mrb[0].mxu0
        %542 = vdwg.mxu0
        %543 = vst [vmem:[%s341] sm:$0xff] %v537
        %544 = vst [vmem:[%s341 + $0x8] sm:$0xff] %v539
        %s545 = sand.u32 %s207, 1
        %s546 = scalar_lea.sflag [#allocation5], %s545
        %s547 = sand.u32 %s207, 1
        %s548 = smul.addr %s547, 16
        %s549 = scalar_lea.vmem [#allocation9], %s548
        // Predicated region
        $region65: #{tpu_custom_call.1} parent=47 // pred_check
          %p550 = pneg %p217
        $region66: #{tpu_custom_call.1} parent=47 // pred_check_branch
          %552 = sbr.rel (%p550) target = $region68
        $region67: #{tpu_custom_call.1} parent=47 // pred_region
          %s553 = smul.u32 2, %s28
          %s555 = ssub.s32 256, 256
          %556 = vsyncadd %s546, %s555
          %s557 = smul.addr %s27, 2
          %s558 = sadd.s32 %s553, %s557
          %s559 = smul.addr %s558, 128
          %s560 = scalar_lea.hbm %s7, %s559
          %s562 = sshll.u32 %s549, 4
          %s563 = int_to_ptr.vmem [resolvable:$true] %s562
          %565 = dma.vmem_to_hbm [thread:$0]  %s563, 256, %s560, %s546
        $region68: #{tpu_custom_call.1} parent=47 // pred_fallthru
          _
      $region48: #{tpu_custom_call.1} parent=5 // pred_fallthru
        _
      %p566 = scmp.le.s32.totalorder 2, %s18
      // Predicated region
      $region69: #{tpu_custom_call.1} parent=5 // pred_check
        %p567 = pneg %p566
      $region70: #{tpu_custom_call.1} parent=5 // pred_check_branch
        %569 = sbr.rel (%p567) target = $region72
      $region71: #{tpu_custom_call.1} parent=5 // pred_region
        %s570 = ssub.s32 %s18, 2
        // Predicated region
        $region73: #{tpu_custom_call.1} parent=71 // pred_check
          %p571 = pneg %p223
        $region74: #{tpu_custom_call.1} parent=71 // pred_check_branch
          %573 = sbr.rel (%p571) target = $region76
        $region75: #{tpu_custom_call.1} parent=71 // pred_region
          %s574 = sand.u32 %s208, 1
          %s575 = scalar_lea.sflag [#allocation5], %s574
          %s576 = sand.u32 %s208, 1
          %s577 = smul.addr %s576, 16
          %s578 = scalar_lea.vmem [#allocation9], %s577
          %579 = dma.done %s575, 256
        $region76: #{tpu_custom_call.1} parent=71 // pred_fallthru
          _
      $region72: #{tpu_custom_call.1} parent=5 // pred_fallthru
        _
    $region6: #{tpu_custom_call.1} parent=1 // loop_footer
      %s22 = sadd.s32 1, %s18
    $region7: #{tpu_custom_call.1} parent=1 // loop_footer_branch
      %17 = sbr.rel target = $region3
    $region8: #{tpu_custom_call.1} parent=1 // loop_exit
      _
    %580 = vsyncpa [#allocation4], 1
    %s581 = scalar_lea.sflag [#allocation4], 1
    %582 = vsyncpa %s581, 1
    %583 = vsyncpa [#allocation7], 1
    %584 = vsyncpa [#allocation5], 1
    %s585 = scalar_lea.sflag [#allocation5], 1
    %586 = vsyncpa %s585, 1

// kernel: tpu_custom_call.1
$region0: #{tpu_custom_call.1}
  #allocation0 [shape = 'u32[]', space=smem, size = 0x4, offset = 0x4, fixed_abs, tag = 'smem constant byte address 0x4 - core index']
  #allocation1 [shape = 'u32[144,128]{1,0:T(1,128)}', space=vmem, size = 0x12000, scoped, tag = 'internal scratch']
  #allocation2 [shape = 'bf16[8,32]{1,0:T(8,128)(2,1)}', space=vmem, size = 0x800, scoped, tag = 'scratch operand']
  %s0 = inlined_call_operand.hbm [shape: f32[16,32], index: 0, kind: input, shape index: {}]
  %s1 = inlined_call_operand.hbm [shape: bf16[32,32], index: 1, kind: input, shape index: {}]
  %s2 = inlined_call_operand.vmem [shape: f32[1,32], index: 2, kind: input, shape index: {}]
  %s3 = inlined_call_operand.vmem [shape: f32[1,32], index: 3, kind: input, shape index: {}]
  %s4 = inlined_call_operand.vmem [shape: f32[1,32], index: 4, kind: input, shape index: {}]
  %s5 = inlined_call_operand.hbm [shape: bf16[32,256], index: 5, kind: input, shape index: {}]
  %s6 = inlined_call_operand.vmem [shape: f32[1,256], index: 6, kind: input, shape index: {}]
  %s7 = inlined_call_operand.hbm [shape: f32[16,256], index: 7, kind: output, shape index: {}]
  %s8 = sld [smem:[#allocation0]]
  $region77: #{tpu_custom_call.1} parent=0
    _
  %s10 = ssub.s32 1, %s8
  %s11 = scalar_select 0, %s10, %s8
  $region1: #{tpu_custom_call.1} parent=0
    #allocation3 [shape = 'u8[8192]{0}', space=vmem, size = 0x2000, scoped, tag = 'input window, operand 0']
    #allocation4 [shape = 's32[2]{0}', space=sflag, size = 0x8, scoped, tag = 'scoped memory for tpu_custom_call.1']
    #allocation5 [shape = 's32[2]{0}', space=sflag, size = 0x8, scoped, tag = 'scoped memory for tpu_custom_call.1']
    #allocation6 [shape = 'u8[8192]{0}', space=vmem, size = 0x2000, scoped, tag = 'input window, operand 1, single buffered']
    #allocation7 [shape = 's32[1]{0}', space=sflag, size = 0x4, scoped, tag = 'scoped memory for tpu_custom_call.1']
    #allocation8 [shape = 'u8[16384]{0}', space=vmem, size = 0x4000, scoped, tag = 'input window, operand 5, single buffered']
    #allocation9 [shape = 'u8[16384]{0}', space=vmem, size = 0x4000, scoped, tag = 'output window, operand 0']
    %12 = vsyncpa [#allocation4], 0
    %s13 = scalar_lea.sflag [#allocation4], 1
    %14 = vsyncpa %s13, 0
    %15 = vsyncpa [#allocation7], 0
    %16 = vsyncpa [#allocation5], 0
    %s17 = scalar_lea.sflag [#allocation5], 1
    %18 = vsyncpa %s17, 0
    loop: start=0, step=1, limit=4
    $region2: #{tpu_custom_call.1} parent=1 // loop_pre_header
      _
    $region3: #{tpu_custom_call.1} parent=1 // loop_header
      %s20 = sphi 0, %s24
      %p21 = scmp.ge.s32.totalorder %s20, 4
      %s27 = sphi 0, %s39
      %s28 = sphi 0, %s35
      %s29 = sphi 0, %s27
      %s30 = sphi 0, %s28
      %s31 = sphi 0, %s29
      %s32 = sphi 0, %s30
      %s42 = sphi 0, %s44
      %s45 = sphi 0, %s42
      %s46 = sphi 0, %s45
      %s62 = sphi 0, %s46
      %s66 = sphi 0, %s66
      %s68 = sphi 0, %s66
      %s69 = sphi 0, %s68
      %s83 = sphi 0, %s69
      %s87 = sphi 0, %s87
      %s89 = sphi 0, %s87
      %s90 = sphi 0, %s89
      %s104 = sphi 0, %s90
      %s108 = sphi 0, %s108
      %s110 = sphi 0, %s108
      %s111 = sphi 0, %s110
      %s125 = sphi 0, %s111
      %s129 = sphi 0, %s129
      %s131 = sphi 0, %s129
      %s132 = sphi 0, %s131
      %s146 = sphi 0, %s132
      %s152 = sphi 0, %s154
      %s155 = sphi 0, %s152
      %s156 = sphi 0, %s155
      %s172 = sphi 0, %s156
      %s178 = sphi 0, %s180
      %s181 = sphi 0, %s178
      %s182 = sphi 0, %s181
      %s198 = sphi 0, %s182
      %s206 = sphi 0, %s208
      %s209 = sphi 0, %s206
      %s210 = sphi 0, %s209
      %s226 = sphi 0, %s210
    $region4: #{tpu_custom_call.1} parent=1 // loop_header_branch
      %23 = sbr.rel (%p21) target = $region8
    $region5: #{tpu_custom_call.1} parent=1 // loop_body
      %s25 = ssub.s32 %s20, 1
      %s26 = ssub.s32 %s20, 2
      %s33 = sadd.s32 1, %s28
      %p34 = scmp.ge.s32.totalorder %s33, 1
      %s35 = scalar_select %p34, 0, %s33
      %s36 = sadd.s32 1, %s27
      %s37 = scalar_select %p34, %s36, %s27
      %p38 = scmp.ge.s32.totalorder %s37, 2
      %s39 = scalar_select %p38, 0, %s37
      %s40 = ssub.s32 %s27, %s39
      %p41 = scmp.eq.s32.totalorder %s40, 0
      %s43 = sadd.s32 %s42, 1
      %s44 = scalar_select %p41, %s42, %s43
      %p47 = pneg %p41
      %p48 = scmp.eq.s32.totalorder %s20, 1
      %p49 = por %p47, %p48
      %p50 = scmp.ne.s32.totalorder %s42, %s45
      %p51 = scmp.eq.s32.totalorder %s20, 0
      %p52 = por %p50, %p51
      %p53 = scmp.ne.s32.totalorder %s42, %s45
      %p54 = scmp.eq.s32.totalorder %s25, 1
      %p55 = por %p53, %p54
      %p56 = scmp.ne.s32.totalorder %s45, %s46
      %p57 = scmp.eq.s32.totalorder %s25, 0
      %p58 = por %p56, %p57
      %p59 = scmp.ne.s32.totalorder %s45, %s46
      %p60 = scmp.eq.s32.totalorder %s26, 1
      %p61 = por %p59, %p60
      %p63 = scmp.ne.s32.totalorder %s46, %s62
      %p64 = scmp.eq.s32.totalorder %s26, 0
      %p65 = por %p63, %p64
      %s67 = sadd.s32 %s66, 1
      %p70 = scmp.eq.s32.totalorder %s20, 1
      %p71 = scmp.ne.s32.totalorder %s66, %s68
      %p72 = scmp.eq.s32.totalorder %s20, 0
      %p73 = por %p71, %p72
      %p74 = scmp.ne.s32.totalorder %s66, %s68
      %p75 = scmp.eq.s32.totalorder %s25, 1
      %p76 = por %p74, %p75
      %p77 = scmp.ne.s32.totalorder %s68, %s69
      %p78 = scmp.eq.s32.totalorder %s25, 0
      %p79 = por %p77, %p78
      %p80 = scmp.ne.s32.totalorder %s68, %s69
      %p81 = scmp.eq.s32.totalorder %s26, 1
      %p82 = por %p80, %p81
      %p84 = scmp.ne.s32.totalorder %s69, %s83
      %p85 = scmp.eq.s32.totalorder %s26, 0
      %p86 = por %p84, %p85
      %s88 = sadd.s32 %s87, 1
      %p91 = scmp.eq.s32.totalorder %s20, 1
      %p92 = scmp.ne.s32.totalorder %s87, %s89
      %p93 = scmp.eq.s32.totalorder %s20, 0
      %p94 = por %p92, %p93
      %p95 = scmp.ne.s32.totalorder %s87, %s89
      %p96 = scmp.eq.s32.totalorder %s25, 1
      %p97 = por %p95, %p96
      %p98 = scmp.ne.s32.totalorder %s89, %s90
      %p99 = scmp.eq.s32.totalorder %s25, 0
      %p100 = por %p98, %p99
      %p101 = scmp.ne.s32.totalorder %s89, %s90
      %p102 = scmp.eq.s32.totalorder %s26, 1
      %p103 = por %p101, %p102
      %p105 = scmp.ne.s32.totalorder %s90, %s104
      %p106 = scmp.eq.s32.totalorder %s26, 0
      %p107 = por %p105, %p106
      %s109 = sadd.s32 %s108, 1
      %p112 = scmp.eq.s32.totalorder %s20, 1
      %p113 = scmp.ne.s32.totalorder %s108, %s110
      %p114 = scmp.eq.s32.totalorder %s20, 0
      %p115 = por %p113, %p114
      %p116 = scmp.ne.s32.totalorder %s108, %s110
      %p117 = scmp.eq.s32.totalorder %s25, 1
      %p118 = por %p116, %p117
      %p119 = scmp.ne.s32.totalorder %s110, %s111
      %p120 = scmp.eq.s32.totalorder %s25, 0
      %p121 = por %p119, %p120
      %p122 = scmp.ne.s32.totalorder %s110, %s111
      %p123 = scmp.eq.s32.totalorder %s26, 1
      %p124 = por %p122, %p123
      %p126 = scmp.ne.s32.totalorder %s111, %s125
      %p127 = scmp.eq.s32.totalorder %s26, 0
      %p128 = por %p126, %p127
      %s130 = sadd.s32 %s129, 1
      %p133 = scmp.eq.s32.totalorder %s20, 1
      %p134 = scmp.ne.s32.totalorder %s129, %s131
      %p135 = scmp.eq.s32.totalorder %s20, 0
      %p136 = por %p134, %p135
      %p137 = scmp.ne.s32.totalorder %s129, %s131
      %p138 = scmp.eq.s32.totalorder %s25, 1
      %p139 = por %p137, %p138
      %p140 = scmp.ne.s32.totalorder %s131, %s132
      %p141 = scmp.eq.s32.totalorder %s25, 0
      %p142 = por %p140, %p141
      %p143 = scmp.ne.s32.totalorder %s131, %s132
      %p144 = scmp.eq.s32.totalorder %s26, 1
      %p145 = por %p143, %p144
      %p147 = scmp.ne.s32.totalorder %s132, %s146
      %p148 = scmp.eq.s32.totalorder %s26, 0
      %p149 = por %p147, %p148
      %s150 = ssub.s32 %s28, %s35
      %p151 = scmp.eq.s32.totalorder %s150, 0
      %s153 = sadd.s32 %s152, 1
      %s154 = scalar_select %p151, %s152, %s153
      %p157 = pneg %p151
      %p158 = scmp.eq.s32.totalorder %s20, 1
      %p159 = por %p157, %p158
      %p160 = scmp.ne.s32.totalorder %s152, %s155
      %p161 = scmp.eq.s32.totalorder %s20, 0
      %p162 = por %p160, %p161
      %p163 = scmp.ne.s32.totalorder %s152, %s155
      %p164 = scmp.eq.s32.totalorder %s25, 1
      %p165 = por %p163, %p164
      %p166 = scmp.ne.s32.totalorder %s155, %s156
      %p167 = scmp.eq.s32.totalorder %s25, 0
      %p168 = por %p166, %p167
      %p169 = scmp.ne.s32.totalorder %s155, %s156
      %p170 = scmp.eq.s32.totalorder %s26, 1
      %p171 = por %p169, %p170
      %p173 = scmp.ne.s32.totalorder %s156, %s172
      %p174 = scmp.eq.s32.totalorder %s26, 0
      %p175 = por %p173, %p174
      %s176 = ssub.s32 %s28, %s35
      %p177 = scmp.eq.s32.totalorder %s176, 0
      %s179 = sadd.s32 %s178, 1
      %s180 = scalar_select %p177, %s178, %s179
      %p183 = pneg %p177
      %p184 = scmp.eq.s32.totalorder %s20, 1
      %p185 = por %p183, %p184
      %p186 = scmp.ne.s32.totalorder %s178, %s181
      %p187 = scmp.eq.s32.totalorder %s20, 0
      %p188 = por %p186, %p187
      %p189 = scmp.ne.s32.totalorder %s178, %s181
      %p190 = scmp.eq.s32.totalorder %s25, 1
      %p191 = por %p189, %p190
      %p192 = scmp.ne.s32.totalorder %s181, %s182
      %p193 = scmp.eq.s32.totalorder %s25, 0
      %p194 = por %p192, %p193
      %p195 = scmp.ne.s32.totalorder %s181, %s182
      %p196 = scmp.eq.s32.totalorder %s26, 1
      %p197 = por %p195, %p196
      %p199 = scmp.ne.s32.totalorder %s182, %s198
      %p200 = scmp.eq.s32.totalorder %s26, 0
      %p201 = por %p199, %p200
      %s202 = ssub.s32 %s27, %s39
      %s203 = ssub.s32 %s28, %s35
      %s204 = sor.u32 %s202, %s203
      %p205 = scmp.eq.s32.totalorder %s204, 0
      %s207 = sadd.s32 %s206, 1
      %s208 = scalar_select %p205, %s206, %s207
      %p211 = pneg %p205
      %p212 = scmp.eq.s32.totalorder %s20, 1
      %p213 = por %p211, %p212
      %p214 = scmp.ne.s32.totalorder %s206, %s209
      %p215 = scmp.eq.s32.totalorder %s20, 0
      %p216 = por %p214, %p215
      %p217 = scmp.ne.s32.totalorder %s206, %s209
      %p218 = scmp.eq.s32.totalorder %s25, 1
      %p219 = por %p217, %p218
      %p220 = scmp.ne.s32.totalorder %s209, %s210
      %p221 = scmp.eq.s32.totalorder %s25, 0
      %p222 = por %p220, %p221
      %p223 = scmp.ne.s32.totalorder %s209, %s210
      %p224 = scmp.eq.s32.totalorder %s26, 1
      %p225 = por %p223, %p224
      %p227 = scmp.ne.s32.totalorder %s210, %s226
      %p228 = scmp.eq.s32.totalorder %s26, 0
      %p229 = por %p227, %p228
      %p230 = scmp.le.s32.totalorder 1, %s20
      %p231 = scmp.lt.s32.totalorder %s20, 3
      %p232 = pnand %p230, %p231
      %p233 = pneg %p232
      // Predicated region
      $region9: #{tpu_custom_call.1} parent=5 // pred_check
        _
      $region10: #{tpu_custom_call.1} parent=5 // pred_check_branch
        %235 = sbr.rel (%p232) target = $region12
      $region11: #{tpu_custom_call.1} parent=5 // pred_region
        %s236 = ssub.s32 %s20, 1
        // Predicated region
        $region13: #{tpu_custom_call.1} parent=11 // pred_check
          %p237 = pneg %p79
        $region14: #{tpu_custom_call.1} parent=11 // pred_check_branch
          %239 = sbr.rel (%p237) target = $region16
        $region15: #{tpu_custom_call.1} parent=11 // pred_region
          %s241 = ssub.s32 256, 256
          %242 = vsyncadd [#allocation7], %s241
          %s243 = sshll.u32 [#allocation6], 4
          %s244 = int_to_ptr.vmem [resolvable:$true] %s243
          %249 = dma.hbm_to_vmem [thread:$0]  %s1, 256, %s244, [#allocation7], 64, 64, 4
        $region16: #{tpu_custom_call.1} parent=11 // pred_fallthru
          _
        // Predicated region
        $region17: #{tpu_custom_call.1} parent=11 // pred_check
          %p250 = pneg %p100
        $region18: #{tpu_custom_call.1} parent=11 // pred_check_branch
          %252 = sbr.rel (%p250) target = $region20
        $region19: #{tpu_custom_call.1} parent=11 // pred_region
          _
        $region20: #{tpu_custom_call.1} parent=11 // pred_fallthru
          _
        // Predicated region
        $region21: #{tpu_custom_call.1} parent=11 // pred_check
          %p253 = pneg %p121
        $region22: #{tpu_custom_call.1} parent=11 // pred_check_branch
          %255 = sbr.rel (%p253) target = $region24
        $region23: #{tpu_custom_call.1} parent=11 // pred_region
          _
        $region24: #{tpu_custom_call.1} parent=11 // pred_fallthru
          _
        // Predicated region
        $region25: #{tpu_custom_call.1} parent=11 // pred_check
          %p256 = pneg %p142
        $region26: #{tpu_custom_call.1} parent=11 // pred_check_branch
          %258 = sbr.rel (%p256) target = $region28
        $region27: #{tpu_custom_call.1} parent=11 // pred_region
          _
        $region28: #{tpu_custom_call.1} parent=11 // pred_fallthru
          _
        // Predicated region
        $region29: #{tpu_custom_call.1} parent=11 // pred_check
          %p259 = pneg %p168
        $region30: #{tpu_custom_call.1} parent=11 // pred_check_branch
          %261 = sbr.rel (%p259) target = $region32
        $region31: #{tpu_custom_call.1} parent=11 // pred_region
          %s262 = smul.u32 2, %s30
          %s264 = ssub.s32 512, 512
          %265 = vsyncadd [#allocation7], %s264
          %s266 = smul.addr %s262, 64
          %s267 = scalar_lea.hbm %s5, %s266
          %s268 = sshll.u32 [#allocation8], 4
          %s269 = int_to_ptr.vmem [resolvable:$true] %s268
          %274 = dma.hbm_to_vmem [thread:$0]  %s267, 512, %s269, [#allocation7], 128, 128, 8
        $region32: #{tpu_custom_call.1} parent=11 // pred_fallthru
          _
        // Predicated region
        $region33: #{tpu_custom_call.1} parent=11 // pred_check
          %p275 = pneg %p194
        $region34: #{tpu_custom_call.1} parent=11 // pred_check_branch
          %277 = sbr.rel (%p275) target = $region36
        $region35: #{tpu_custom_call.1} parent=11 // pred_region
          %s278 = smul.u32 2, %s30
          %p279 = scmp.lt.s32.totalorder %s278, 1
          %s280 = scalar_select %p279, %s278, 1
          %s281 = scalar_lea.vmem %s6, %s280
          %s282 = smul.u32 2, %s30
        $region36: #{tpu_custom_call.1} parent=11 // pred_fallthru
          _
      $region12: #{tpu_custom_call.1} parent=5 // pred_fallthru
        _
      %p283 = scmp.lt.s32.totalorder %s20, 2
      // Predicated region
      $region37: #{tpu_custom_call.1} parent=5 // pred_check
        %p284 = pneg %p283
      $region38: #{tpu_custom_call.1} parent=5 // pred_check_branch
        %286 = sbr.rel (%p284) target = $region40
      $region39: #{tpu_custom_call.1} parent=5 // pred_region
        // Predicated region
        $region41: #{tpu_custom_call.1} parent=39 // pred_check
          %p287 = pneg %p52
        $region42: #{tpu_custom_call.1} parent=39 // pred_check_branch
          %289 = sbr.rel (%p287) target = $region44
        $region43: #{tpu_custom_call.1} parent=39 // pred_region
          %s290 = sand.u32 %s42, 1
          %s291 = scalar_lea.sflag [#allocation4], %s290
          %s292 = sand.u32 %s42, 1
          %s293 = smul.addr %s292, 8
          %s294 = scalar_lea.vmem [#allocation3], %s293
          %s296 = ssub.s32 128, 128
          %297 = vsyncadd %s291, %s296
          %s298 = smul.addr %s27, 128
          %s299 = scalar_lea.hbm %s0, %s298
          %s301 = sshll.u32 %s294, 4
          %s302 = int_to_ptr.vmem [resolvable:$true] %s301
          %304 = dma.hbm_to_vmem [thread:$0]  %s299, 128, %s302, %s291
        $region44: #{tpu_custom_call.1} parent=39 // pred_fallthru
          _
      $region40: #{tpu_custom_call.1} parent=5 // pred_fallthru
        _
      %p305 = scmp.le.s32.totalorder 1, %s20
      %p306 = scmp.lt.s32.totalorder %s20, 3
      %p307 = pnand %p305, %p306
      %p308 = pneg %p307
      // Predicated region
      $region45: #{tpu_custom_call.1} parent=5 // pred_check
        _
      $region46: #{tpu_custom_call.1} parent=5 // pred_check_branch
        %310 = sbr.rel (%p307) target = $region48
      $region47: #{tpu_custom_call.1} parent=5 // pred_region
        %s311 = ssub.s32 %s20, 1
        %s312 = sand.u32 %s45, 1
        %s313 = scalar_lea.sflag [#allocation4], %s312
        %s314 = sand.u32 %s45, 1
        %s315 = smul.addr %s314, 8
        %s316 = scalar_lea.vmem [#allocation3], %s315
        // Predicated region
        $region49: #{tpu_custom_call.1} parent=47 // pred_check
          %p317 = pneg %p58
        $region50: #{tpu_custom_call.1} parent=47 // pred_check_branch
          %319 = sbr.rel (%p317) target = $region52
        $region51: #{tpu_custom_call.1} parent=47 // pred_region
          %320 = dma.done %s313, 128
        $region52: #{tpu_custom_call.1} parent=47 // pred_fallthru
          _
        // Predicated region
        $region53: #{tpu_custom_call.1} parent=47 // pred_check
          %p321 = pneg %p79
        $region54: #{tpu_custom_call.1} parent=47 // pred_check_branch
          %323 = sbr.rel (%p321) target = $region56
        $region55: #{tpu_custom_call.1} parent=47 // pred_region
          %324 = dma.done [#allocation7], 256
        $region56: #{tpu_custom_call.1} parent=47 // pred_fallthru
          _
        // Predicated region
        $region57: #{tpu_custom_call.1} parent=47 // pred_check
          %p325 = pneg %p168
        $region58: #{tpu_custom_call.1} parent=47 // pred_check_branch
          %327 = sbr.rel (%p325) target = $region60
        $region59: #{tpu_custom_call.1} parent=47 // pred_region
          %328 = dma.done [#allocation7], 512
        $region60: #{tpu_custom_call.1} parent=47 // pred_fallthru
          _
        %s329 = sand.u32 %s45, 1
        %s330 = scalar_lea.sflag [#allocation4], %s329
        %s331 = sand.u32 %s45, 1
        %s332 = smul.addr %s331, 8
        %s333 = scalar_lea.vmem [#allocation3], %s332
        %p334 = pneg %p58
        %p335 = pneg %p55
        %p336 = pneg %p79
        %p337 = pneg %p76
        %p338 = pneg %p100
        %p339 = pneg %p97
        %p340 = pneg %p121
        %p341 = pneg %p118
        %p342 = pneg %p142
        %p343 = pneg %p139
        %p344 = pneg %p168
        %p345 = pneg %p165
        %s346 = smul.u32 2, %s30
        %p347 = scmp.lt.s32.totalorder %s346, 1
        %s348 = scalar_select %p347, %s346, 1
        %s349 = scalar_lea.vmem %s6, %s348
        %p350 = pneg %p194
        %p351 = pneg %p191
        %p352 = pneg %p222
        %p353 = pneg %p219
        %s354 = sand.u32 %s209, 1
        %s355 = scalar_lea.sflag [#allocation5], %s354
        %s356 = sand.u32 %s209, 1
        %s357 = smul.addr %s356, 16
        %s358 = scalar_lea.vmem [#allocation9], %s357
        %s359 = smul.u32 2, %s30
        %s360 = smul.u32 2, %s30
        %p361 = scmp.lt.s32.totalorder %s360, 1
        %s362 = scalar_select %p361, %s360, 1
        %s363 = scalar_lea.vmem %s6, %s362
        %s364 = smul.u32 2, %s30
        %s365 = smul.u32 2, %s30
        %p367 = scmp.eq.s32.totalorder %s30, 0
        // Predicated region
        $region61: #{tpu_custom_call.1} parent=47 // pred_check
          %p368 = pneg %p367
        $region62: #{tpu_custom_call.1} parent=47 // pred_check_branch
          %370 = sbr.rel (%p368) target = $region64
        $region63: #{tpu_custom_call.1} parent=47 // pred_region
          %v371 = vld [vmem:[%s316] sm:$0xff]
          %v372 = vpack.c.bf16 %v371, %v371
          %v373 = vld [vmem:[#allocation6] sm:$0xf]
          %v374 = vld [vmem:[#allocation6 + $0x4] sm:$0xf]
          %v375 = vld [vmem:[#allocation6 + $0x8] sm:$0xf]
          %v376 = vld [vmem:[#allocation6 + $0xc] sm:$0xf]
          %v377 = vld [vmem:[%s2] sm:$0x1]
          %v379 = vlaneseq
          %v380 = vshrl.u32 %v379, 7
          %v381 = vsub.s32 0, %v380
          %v382 = vrot.slane %v377, %v381
          %v388 = vunpack.c.l.b16 %v373
          %v389 = vunpack.c.l.b16 %v374
          %v390 = vunpack.c.l.b16 %v375
          %v391 = vunpack.c.l.b16 %v376
          %v392 = vpack.c.b16 %v389, %v388
          %v393 = vpack.c.b16 %v391, %v390
          %vm396 = vcmask 261120
          %v398 = vsel %vm396, %v372, 0
          %400 = vmatprep.subr.bf16.mxu0 0
          %401 = vmatpush1.bf16.msra.mxu0 %v392
          %402 = vmatprep.subr.bf16.mxu0 0
          %403 = vmatpush1.bf16.msra.mxu0 %v393
          %404 = vmatprep.subr.bf16.mxu0 0
          %405 = vmatpush1.bf16.msra.mxu0 0
          %406 = vmatprep.subr.bf16.mxu0 0
          %407 = vmatpush1.bf16.msra.mxu0 0
          %408 = vmatprep.subr.bf16.mxu0 0
          %409 = vmatpush1.bf16.msra.mxu0 0
          %410 = vmatprep.subr.bf16.mxu0 0
          %411 = vmatpush1.bf16.msra.mxu0 0
          %412 = vmatprep.subr.bf16.mxu0 0
          %413 = vmatpush1.bf16.msra.mxu0 0
          %414 = vmatprep.subr.bf16.mxu0 0
          %415 = vmatpush1.bf16.msra.mxu0 0
          %416 = vmatprep.subr.bf16.mxu0 0
          %417 = vmatpush1.bf16.msra.mxu0 0
          %418 = vmatprep.subr.bf16.mxu0 0
          %419 = vmatpush1.bf16.msra.mxu0 0
          %420 = vmatprep.subr.bf16.mxu0 0
          %421 = vmatpush1.bf16.msra.mxu0 0
          %422 = vmatprep.subr.bf16.mxu0 0
          %423 = vmatpush1.bf16.msra.mxu0 0
          %424 = vmatprep.subr.bf16.mxu0 0
          %425 = vmatpush1.bf16.msra.mxu0 0
          %426 = vmatprep.subr.bf16.mxu0 0
          %427 = vmatpush1.bf16.msra.mxu0 0
          %428 = vmatprep.subr.bf16.mxu0 0
          %429 = vmatpush1.bf16.msra.mxu0 0
          %430 = vmatprep.subr.bf16.mxu0 0
          %431 = vmatpush1.bf16.msra.mxu0 0
          %432 = vmatprep.mubr.bf16.mxu0 0
          %433 = vmatmul.mubr.bf16.gmra.mrb[0].mxu0 %v398
          %v434 = vpop.f32.mrb[0].mxu0
          %v435 = vadd.f32 %v382, %v434
          %v436 = vpop.f32.mrb[0].mxu0
          %v437 = vpop.f32.mrb[0].mxu0
          %v438 = vpop.f32.mrb[0].mxu0
          %439 = vdwg.mxu0
          %v440 = vmul.f32 %v435, 0.5
          %v441 = vmul.f32 %v435, 0.70710677
          %v442 = verf.f32.pop %v441
          %v443 = vadd.f32 %v442, 1.0
          %v444 = vmul.f32 %v440, %v443
          %v445 = vsel %vm396, %v444, 0.0
          %446 = vadd.xlane.f32.xlu0 %v445
          %v447 = vpop.xlane.xlu0 %446
          %v448 = vrcp.pop 32.0
          %v449 = vmul.f32 %v447, %v448
          %v450 = vsub.f32 %v444, %v449
          %v451 = vmul.f32 %v450, %v450
          %v452 = vsel %vm396, %v451, 0.0
          %453 = vadd.xlane.f32.xlu0 %v452
          %v454 = vpop.xlane.xlu0 %453
          %v455 = vmul.f32 %v454, %v448
          %v456 = vadd.f32 %v455, 1e-05
          %v457 = vrsqrt.pop %v456
          %v458 = vmul.f32 %v450, %v457
          %v459 = vld [vmem:[%s3] sm:$0x1]
          %v461 = vlaneseq
          %v462 = vshrl.u32 %v461, 7
          %v463 = vsub.s32 0, %v462
          %v464 = vrot.slane %v459, %v463
          %v466 = vmul.f32 %v458, %v464
          %v467 = vld [vmem:[%s4] sm:$0x1]
          %v469 = vlaneseq
          %v470 = vshrl.u32 %v469, 7
          %v471 = vsub.s32 0, %v470
          %v472 = vrot.slane %v467, %v471
          %v474 = vadd.f32 %v466, %v472
          %v475 = vpack.c.bf16 %v474, %v474
          %vm476 = vcmask 257024
          %477 = vst.msk [vmem:[#allocation2] sm:$0xf] %vm476, %v475
        $region64: #{tpu_custom_call.1} parent=47 // pred_fallthru
          _
        %v478 = vld [vmem:[#allocation2] sm:$0xf]
        %v479 = vld [vmem:[#allocation8] sm:$0xff]
        %v480 = vld [vmem:[#allocation8 + $0x8] sm:$0xff]
        %v481 = vld [vmem:[#allocation8 + $0x10] sm:$0xff]
        %v482 = vld [vmem:[#allocation8 + $0x18] sm:$0xff]
        %v483 = vld [vmem:[%s363] sm:$0x3]
        %v485 = vlaneseq
        %v486 = vshrl.u32 %v485, 7
        %v487 = vsub.s32 0, %v486
        %v488 = vrot.slane %v483, %v487
        %v489 = vlaneseq
        %v490 = vshrl.u32 %v489, 7
        %v491 = vsub.s32 1, %v490
        %v492 = vrot.slane %v483, %v491
        %v499 = vunpack.c.l.b16 %v479
        %v500 = vunpack.c.h.b16 %v479
        %v501 = vunpack.c.l.b16 %v480
        %v502 = vunpack.c.h.b16 %v480
        %v503 = vunpack.c.l.b16 %v481
        %v504 = vunpack.c.h.b16 %v481
        %v505 = vunpack.c.l.b16 %v482
        %v506 = vunpack.c.h.b16 %v482
        %v507 = vpack.c.b16 %v501, %v499
        %v508 = vpack.c.b16 %v502, %v500
        %v509 = vpack.c.b16 %v505, %v503
        %v510 = vpack.c.b16 %v506, %v504
        %vm515 = vcmask 261120
        %v517 = vsel %vm515, %v478, 0
        %519 = vmatprep.subr.bf16.mxu0 %v508
        %520 = vmatpush1.bf16.msra.mxu0 %v507
        %521 = vmatprep.subr.bf16.mxu0 %v510
        %522 = vmatpush1.bf16.msra.mxu0 %v509
        %523 = vmatprep.subr.bf16.mxu0 0
        %524 = vmatpush1.bf16.msra.mxu0 0
        %525 = vmatprep.subr.bf16.mxu0 0
        %526 = vmatpush1.bf16.msra.mxu0 0
        %527 = vmatprep.subr.bf16.mxu0 0
        %528 = vmatpush1.bf16.msra.mxu0 0
        %529 = vmatprep.subr.bf16.mxu0 0
        %530 = vmatpush1.bf16.msra.mxu0 0
        %531 = vmatprep.subr.bf16.mxu0 0
        %532 = vmatpush1.bf16.msra.mxu0 0
        %533 = vmatprep.subr.bf16.mxu0 0
        %534 = vmatpush1.bf16.msra.mxu0 0
        %535 = vmatprep.subr.bf16.mxu0 0
        %536 = vmatpush1.bf16.msra.mxu0 0
        %537 = vmatprep.subr.bf16.mxu0 0
        %538 = vmatpush1.bf16.msra.mxu0 0
        %539 = vmatprep.subr.bf16.mxu0 0
        %540 = vmatpush1.bf16.msra.mxu0 0
        %541 = vmatprep.subr.bf16.mxu0 0
        %542 = vmatpush1.bf16.msra.mxu0 0
        %543 = vmatprep.subr.bf16.mxu0 0
        %544 = vmatpush1.bf16.msra.mxu0 0
        %545 = vmatprep.subr.bf16.mxu0 0
        %546 = vmatpush1.bf16.msra.mxu0 0
        %547 = vmatprep.subr.bf16.mxu0 0
        %548 = vmatpush1.bf16.msra.mxu0 0
        %549 = vmatprep.subr.bf16.mxu0 0
        %550 = vmatpush1.bf16.msra.mxu0 0
        %551 = vmatprep.mubr.bf16.mxu0 0
        %552 = vmatmul.mubr.bf16.gmra.mrb[0].mxu0 %v517
        %v553 = vpop.f32.mrb[0].mxu0
        %v554 = vadd.f32 %v488, %v553
        %v555 = vpop.f32.mrb[0].mxu0
        %v556 = vadd.f32 %v492, %v555
        %v557 = vpop.f32.mrb[0].mxu0
        %v558 = vpop.f32.mrb[0].mxu0
        %559 = vdwg.mxu0
        %560 = vst [vmem:[%s358] sm:$0xff] %v554
        %561 = vst [vmem:[%s358 + $0x8] sm:$0xff] %v556
        %s562 = sand.u32 %s209, 1
        %s563 = scalar_lea.sflag [#allocation5], %s562
        %s564 = sand.u32 %s209, 1
        %s565 = smul.addr %s564, 16
        %s566 = scalar_lea.vmem [#allocation9], %s565
        // Predicated region
        $region65: #{tpu_custom_call.1} parent=47 // pred_check
          %p567 = pneg %p219
        $region66: #{tpu_custom_call.1} parent=47 // pred_check_branch
          %569 = sbr.rel (%p567) target = $region68
        $region67: #{tpu_custom_call.1} parent=47 // pred_region
          %s570 = smul.u32 2, %s30
          %s572 = ssub.s32 256, 256
          %573 = vsyncadd %s563, %s572
          %s574 = smul.addr %s29, 2
          %s575 = sadd.s32 %s570, %s574
          %s576 = smul.addr %s575, 128
          %s577 = scalar_lea.hbm %s7, %s576
          %s579 = sshll.u32 %s566, 4
          %s580 = int_to_ptr.vmem [resolvable:$true] %s579
          %582 = dma.vmem_to_hbm [thread:$0]  %s580, 256, %s577, %s563
        $region68: #{tpu_custom_call.1} parent=47 // pred_fallthru
          _
      $region48: #{tpu_custom_call.1} parent=5 // pred_fallthru
        _
      %p583 = scmp.le.s32.totalorder 2, %s20
      // Predicated region
      $region69: #{tpu_custom_call.1} parent=5 // pred_check
        %p584 = pneg %p583
      $region70: #{tpu_custom_call.1} parent=5 // pred_check_branch
        %586 = sbr.rel (%p584) target = $region72
      $region71: #{tpu_custom_call.1} parent=5 // pred_region
        %s587 = ssub.s32 %s20, 2
        // Predicated region
        $region73: #{tpu_custom_call.1} parent=71 // pred_check
          %p588 = pneg %p225
        $region74: #{tpu_custom_call.1} parent=71 // pred_check_branch
          %590 = sbr.rel (%p588) target = $region76
        $region75: #{tpu_custom_call.1} parent=71 // pred_region
          %s591 = sand.u32 %s210, 1
          %s592 = scalar_lea.sflag [#allocation5], %s591
          %s593 = sand.u32 %s210, 1
          %s594 = smul.addr %s593, 16
          %s595 = scalar_lea.vmem [#allocation9], %s594
          %596 = dma.done %s592, 256
        $region76: #{tpu_custom_call.1} parent=71 // pred_fallthru
          _
      $region72: #{tpu_custom_call.1} parent=5 // pred_fallthru
        _
    $region6: #{tpu_custom_call.1} parent=1 // loop_footer
      %s24 = sadd.s32 1, %s20
    $region7: #{tpu_custom_call.1} parent=1 // loop_footer_branch
      %19 = sbr.rel target = $region3
    $region8: #{tpu_custom_call.1} parent=1 // loop_exit
      _
    %597 = vsyncpa [#allocation4], 1
    %s598 = scalar_lea.sflag [#allocation4], 1
    %599 = vsyncpa %s598, 1
    %600 = vsyncpa [#allocation7], 1
    %601 = vsyncpa [#allocation5], 1
    %s602 = scalar_lea.sflag [#allocation5], 1
    %603 = vsyncpa %s602, 1

</llo_original>
